<compile_context>
chip_gen: v7x
topology: tpu7x:2x2x1
jax: 0.10.0
libtpu: 0.0.40
codegen_flags: <defaults>
</compile_context>

<pallas_src>
import functools

import jax
import jax.numpy as jnp
from jax import lax
from jax.experimental import pallas as pl
from jax.experimental.pallas import tpu as pltpu


def _zero_norm(x, axis):
    # zero_norm_t: subtract mean and divide by L2 norm along `axis`.
    # NOTE: like the PyTorch module, no epsilon -> NaN if the slice is constant.
    m = jnp.mean(x, axis=axis, keepdims=True)
    xc = x - m
    return xc / jnp.sqrt(jnp.sum(xc * xc, axis=axis, keepdims=True))


def _zncc_kernel(x_ref, w_ref, wnT_ref, idx1_ref, zncc_ref, depth_ref, *, beta):
    # x_ref    : (1, n_tbins, TL)  histogram tile, native NCW layout
    # w_ref    : (k, n_tbins)      coding matrix
    # wnT_ref  : (n_tbins, k)      zero-normed coding matrix, pre-transposed
    # idx1_ref : (2, n_tbins)      row 0 = soft-argmax indices, row 1 = ones
    # zncc_ref : (1, n_tbins, TL)  output tile (native layout, no transpose)
    # depth_ref: (1, 1, TL)        soft-argmax depths (lane-dense)
    x = x_ref[0]                       # (n_tbins, TL)
    w = w_ref[...]                     # (k, n_tbins)
    wnT = wnT_ref[...]                 # (n_tbins, k)
    idx1 = idx1_ref[...]               # (2, n_tbins)

    # Conv1d(kernel_size=1, bias=False): coded[o, l] = sum_t w[o, t] * x[t, l]
    coded = jnp.dot(w, x, preferred_element_type=jnp.float32)          # (k, TL)

    # zero_norm_t over the code dimension k.  Since w_nT rows are zero-mean
    # over k, wnT @ (coded - m) == wnT @ coded, so feed un-centered `coded`
    # straight to the MXU and apply the per-column rsqrt scale afterwards.
    m = jnp.mean(coded, axis=0, keepdims=True)                          # (1, TL)
    cc = coded - m                                                      # k rows only (cheap)
    inv_nrm = lax.rsqrt(jnp.sum(cc * cc, axis=0, keepdims=True))        # (1, TL)

    zncc = jnp.dot(wnT, coded, preferred_element_type=jnp.float32) * inv_nrm
    zncc_ref[0] = zncc.astype(zncc_ref.dtype)

    # softargmax over n_tbins.  |zncc| <= 1 by construction, so shift by the
    # constant 1 instead of a per-column max (no XLU reduce, no extra temp).
    # Precondition: per column max(zncc) > 1 - 87/beta so exp() does not fully
    # underflow in f32 (holds for any non-degenerate coding / input).
    e = jnp.exp(zncc * beta - beta)                                     # (n_tbins, TL)
    nd = jnp.dot(idx1, e, preferred_element_type=jnp.float32)           # (2, TL): [num; den]
    depth_ref[0] = nd[0:1, :] / nd[1:2, :]                              # exact divide (off crit path)


def _round_up(x, m):
    return (x + m - 1) // m * m


def _vmem_capacity_bytes():
    try:
        return int(pltpu.get_tpu_info().vmem_capacity_bytes)
    except Exception:
        return 64 << 20  # v7x-safe fallback if the query is unavailable


def _pick_tile_l(L, n_tbins, B):
    """Largest lane tile (multiple of 128) whose VMEM footprint fits, including
    in-kernel temporaries: double-buffered x + zncc (16*n_tbins B/col) plus the
    exp temp and the zncc value (~12*n_tbins B/col) -> 28*n_tbins B/col."""
    vmem_total = _vmem_capacity_bytes()
    per_col = 28 * n_tbins
    max_tile = 8192 if vmem_total >= (96 << 20) else 2048   # 128 MiB parts vs v7x
    budget = int(vmem_total * 0.70)                          # headroom for constants/scratch
    tile = (budget // per_col) // 128 * 128
    tile = max(128, min(tile, max_tile, _round_up(L, 128)))
    # v7x megacore: make sure >= 2 "parallel" grid steps exist.
    while B * ((L + tile - 1) // tile) < 2 and tile > 128:
        tile = max(128, (tile // 2) // 128 * 128)
    return tile


def zncc_coding_forward(input_hist, weight, *, beta=100.0, tile_l=None,
                        zncc_dtype=jnp.float32):
    """input_hist: (B, n_tbins, L) f32 (PyTorch NCW); weight: (k, n_tbins, 1) f32."""
    B, n_tbins, L = input_hist.shape
    k = weight.shape[0]

    if tile_l is None:
        tile_l = _pick_tile_l(L, n_tbins, B)
    assert tile_l % 128 == 0

    # Pad L up to a tile multiple (edge values -> numerically benign), crop later.
    L_pad = _round_up(L, tile_l)
    x = input_hist.astype(jnp.float32)                        # native NCW, no transpose
    if L_pad != L:
        x = jnp.pad(x, ((0, 0), (0, 0), (0, L_pad - L)), mode="edge")

    w = weight[..., 0].astype(jnp.float32)                    # (k, n_tbins)
    # Grid-invariant work hoisted to the wrapper: zero-norm of the coding matrix
    # over k, pre-transposed; fused [indices; ones] soft-argmax weights.
    w_nT = jnp.transpose(_zero_norm(w, axis=0))               # (n_tbins, k)
    idx1 = jnp.stack([jnp.arange(n_tbins, dtype=jnp.float32),
                      jnp.ones((n_tbins,), jnp.float32)])     # (2, n_tbins)

    vmem_total = _vmem_capacity_bytes()
    footprint = 28 * n_tbins * tile_l
    vmem_limit = int(min(footprint + (8 << 20), vmem_total - (4 << 20)))

    # Constant operands (w, w_nT, idx1) use constant index_maps -> fetched once.
    zncc, depth = pl.pallas_call(
        functools.partial(_zncc_kernel, beta=float(beta)),
        out_shape=(
            jax.ShapeDtypeStruct((B, n_tbins, L_pad), zncc_dtype),
            jax.ShapeDtypeStruct((B, 1, L_pad), jnp.float32),
        ),
        grid_spec=pltpu.PrefetchScalarGridSpec(
            num_scalar_prefetch=0,
            grid=(B, L_pad // tile_l),
            in_specs=[
                pl.BlockSpec((1, n_tbins, tile_l), lambda b, i: (b, 0, i)),
                pl.BlockSpec((k, n_tbins), lambda b, i: (0, 0)),
                pl.BlockSpec((n_tbins, k), lambda b, i: (0, 0)),
                pl.BlockSpec((2, n_tbins), lambda b, i: (0, 0)),
            ],
            out_specs=[
                pl.BlockSpec((1, n_tbins, tile_l), lambda b, i: (b, 0, i)),
                pl.BlockSpec((1, 1, tile_l), lambda b, i: (b, 0, i)),
            ],
        ),
        compiler_params=pltpu.CompilerParams(
            dimension_semantics=("parallel", "parallel"),
            vmem_limit_bytes=vmem_limit),
    )(x, w, w_nT, idx1)

    # Crop the padded tail; torch .squeeze(-1) is a no-op for L > 1.
    return zncc[..., :L], depth[:, 0, :L]


def _reference_forward(input_hist, weight, beta):
    """Pure-JAX reference mirroring the PyTorch module (irf=None)."""
    w = weight[..., 0]                                                 # (k, n_tbins)
    coded = jnp.einsum("btl,kt->bkl", input_hist, w)                   # Conv1d k=1
    input_norm = _zero_norm(coded, axis=-2)                            # (B, k, L)
    corr_norm = _zero_norm(w, axis=0)                                  # (k, n_tbins)
    zncc = jnp.einsum("bkl,kt->btl", input_norm, corr_norm)            # (B, n_tbins, L)
    sm = jax.nn.softmax(beta * zncc, axis=-2)
    idx = jnp.arange(zncc.shape[1], dtype=jnp.float32).reshape(1, -1, 1)
    pred = jnp.sum(sm * idx, axis=-2)                                  # (B, L)
    return zncc, pred


if __name__ == "__main__":
    # Small shapes consistent with the module: batch=2, n_tbins=256, L=512, k=4.
    B, n_tbins, L, k = 2, 256, 512, 4
    beta = 100.0

    # Coding matrix: truncated-Fourier scheme (cos/sin at 2 harmonics), like the
    # module's init_coding_mat path.  This gives zncc a single clear peak per
    # pixel so the beta=100 soft-argmax is well conditioned and the end-to-end
    # depth comparison is meaningful (a kaiming-random k=3 matrix makes the
    # soft-argmax ill-conditioned for any input).
    t = jnp.arange(n_tbins, dtype=jnp.float32)
    phase = 2.0 * jnp.pi * t / n_tbins
    weight = jnp.stack([jnp.cos(phase), jnp.sin(phase),
                        jnp.cos(2.0 * phase), jnp.sin(2.0 * phase)])[..., None]  # (k, n_tbins, 1)

    # Synthetic histograms: one Gaussian pulse per pixel at a deterministic
    # pseudo-random depth bin plus a small ambient floor (NCW layout).
    key = jax.random.PRNGKey(0)
    true_depths = jax.random.uniform(key, (B, 1, L), jnp.float32, 20.0, 235.0)
    bins = t.reshape(1, n_tbins, 1)
    input_hist = jnp.exp(-0.5 * ((bins - true_depths) / 2.5) ** 2) + 0.01

    # TODO(synk): irf/account_illum branch uses torch.fft (FFT correlation of the
    # coding matrix with the IRF); no clean in-kernel Pallas equivalent, so only
    # the irf=None path is implemented.

    zncc, pred_depths = zncc_coding_forward(input_hist, weight, beta=beta)
    jax.block_until_ready((zncc, pred_depths))

    zncc_ref, pred_ref = _reference_forward(input_hist, weight, beta)
    assert zncc.shape == (B, n_tbins, L) and pred_depths.shape == (B, L)
    assert jnp.allclose(zncc, zncc_ref, atol=1e-4, rtol=1e-4), (
        "zncc max abs diff = %g" % float(jnp.max(jnp.abs(zncc - zncc_ref))))
    # Depth tolerance of 0.05 bins (out of 256): the soft-argmax is exact-divide
    # in the kernel; remaining differences are f32 matmul/exp rounding only.
    assert jnp.allclose(pred_depths, pred_ref, atol=5e-2, rtol=0.0), (
        "depth max abs diff = %g" % float(jnp.max(jnp.abs(pred_depths - pred_ref))))

    print("KERNEL_OK")
</pallas_src>

<mosaic_0001>
module attributes {stable_mosaic.version = 11 : i64} {
  func.func @_zncc_kernel(%arg0: i32, %arg1: i32, %arg2: memref<1x256x512xf32, #tpu.memory_space<vmem>>, %arg3: memref<4x256xf32, #tpu.memory_space<vmem>>, %arg4: memref<256x4xf32, #tpu.memory_space<vmem>>, %arg5: memref<2x256xf32, #tpu.memory_space<vmem>>, %arg6: memref<1x256x512xf32, #tpu.memory_space<vmem>>, %arg7: memref<1x1x512xf32, #tpu.memory_space<vmem>>) attributes {dimension_semantics = [#tpu.dimension_semantics<parallel>, #tpu.dimension_semantics<parallel>], iteration_bounds = array<i64: 2, 1>, scalar_prefetch = 0 : i64, scratch_operands = 0 : i64, tpu.core_type = #tpu.core_type<tc>, window_params = [{transform_indices = @transform_0, window_bounds = array<i64: 1, 256, 512>}, {pipeline_mode = #tpu.pipeline_mode<synchronous>, transform_indices = @transform_1, window_bounds = array<i64: 4, 256>}, {pipeline_mode = #tpu.pipeline_mode<synchronous>, transform_indices = @transform_2, window_bounds = array<i64: 256, 4>}, {pipeline_mode = #tpu.pipeline_mode<synchronous>, transform_indices = @transform_3, window_bounds = array<i64: 2, 256>}, {transform_indices = @transform_4, window_bounds = array<i64: 1, 256, 512>}, {transform_indices = @transform_5, window_bounds = array<i64: 1, 1, 512>}]} {
    %c0 = arith.constant 0 : index
    %c0_0 = arith.constant 0 : index
    %c0_1 = arith.constant 0 : index
    %0 = vector.load %arg2[%c0, %c0_0, %c0_1] : memref<1x256x512xf32, #tpu.memory_space<vmem>>, vector<1x256x512xf32>
    %1 = vector.shape_cast %0 : vector<1x256x512xf32> to vector<256x512xf32>
    %c0_2 = arith.constant 0 : index
    %c0_3 = arith.constant 0 : index
    %2 = vector.load %arg3[%c0_2, %c0_3] : memref<4x256xf32, #tpu.memory_space<vmem>>, vector<4x256xf32>
    %c0_4 = arith.constant 0 : index
    %c0_5 = arith.constant 0 : index
    %3 = vector.load %arg4[%c0_4, %c0_5] : memref<256x4xf32, #tpu.memory_space<vmem>>, vector<256x4xf32>
    %c0_6 = arith.constant 0 : index
    %c0_7 = arith.constant 0 : index
    %4 = vector.load %arg5[%c0_6, %c0_7] : memref<2x256xf32, #tpu.memory_space<vmem>>, vector<2x256xf32>
    %cst = arith.constant dense<0.000000e+00> : vector<4x512xf32>
    %5 = tpu.matmul %2, %1, %cst {dimension_numbers = #tpu.dot_dimension_numbers<[1], [0], [0], [1], [0, 0, 1, 1], [], []>} : vector<4x256xf32>, vector<256x512xf32>, vector<4x512xf32> -> vector<4x512xf32>
    %cst_8 = arith.constant dense<0.000000e+00> : vector<512xf32>
    %6 = vector.multi_reduction <add>, %5, %cst_8 [0] : vector<4x512xf32> to vector<512xf32>
    %7 = vector.shape_cast %6 : vector<512xf32> to vector<1x512xf32>
    %cst_9 = arith.constant 4.000000e+00 : f32
    %8 = vector.broadcast %cst_9 : f32 to vector<1x512xf32>
    %9 = arith.divf %7, %8 : vector<1x512xf32>
    %10 = vector.broadcast %9 : vector<1x512xf32> to vector<4x512xf32>
    %11 = arith.subf %5, %10 : vector<4x512xf32>
    %12 = arith.mulf %11, %11 : vector<4x512xf32>
    %cst_10 = arith.constant dense<0.000000e+00> : vector<512xf32>
    %13 = vector.multi_reduction <add>, %12, %cst_10 [0] : vector<4x512xf32> to vector<512xf32>
    %14 = vector.shape_cast %13 : vector<512xf32> to vector<1x512xf32>
    %15 = math.rsqrt %14 : vector<1x512xf32>
    %cst_11 = arith.constant dense<0.000000e+00> : vector<256x512xf32>
    %16 = tpu.matmul %3, %5, %cst_11 {dimension_numbers = #tpu.dot_dimension_numbers<[1], [0], [0], [1], [0, 0, 1, 1], [], []>} : vector<256x4xf32>, vector<4x512xf32>, vector<256x512xf32> -> vector<256x512xf32>
    %17 = vector.broadcast %15 : vector<1x512xf32> to vector<256x512xf32>
    %18 = arith.mulf %16, %17 : vector<256x512xf32>
    %c0_12 = arith.constant 0 : index
    %c0_13 = arith.constant 0 : index
    %c0_14 = arith.constant 0 : index
    %19 = vector.load %arg6[%c0_12, %c0_13, %c0_14] : memref<1x256x512xf32, #tpu.memory_space<vmem>>, vector<1x256x512xf32>
    %20 = vector.shape_cast %19 : vector<1x256x512xf32> to vector<256x512xf32>
    %21 = vector.shape_cast %18 : vector<256x512xf32> to vector<1x256x512xf32>
    tpu.vector_store %arg6[%c0_12, %c0_13, %c0_14], %21 {strides = array<i32>} : memref<1x256x512xf32, #tpu.memory_space<vmem>>, vector<1x256x512xf32>,
    %cst_15 = arith.constant 1.000000e+02 : f32
    %22 = vector.broadcast %cst_15 : f32 to vector<256x512xf32>
    %23 = arith.mulf %18, %22 : vector<256x512xf32>
    %cst_16 = arith.constant 1.000000e+02 : f32
    %24 = vector.broadcast %cst_16 : f32 to vector<256x512xf32>
    %25 = arith.subf %23, %24 : vector<256x512xf32>
    %26 = math.exp %25 : vector<256x512xf32>
    %cst_17 = arith.constant dense<0.000000e+00> : vector<2x512xf32>
    %27 = tpu.matmul %4, %26, %cst_17 {dimension_numbers = #tpu.dot_dimension_numbers<[1], [0], [0], [1], [0, 0, 1, 1], [], []>} : vector<2x256xf32>, vector<256x512xf32>, vector<2x512xf32> -> vector<2x512xf32>
    %28 = vector.extract_strided_slice %27 {offsets = [0, 0], sizes = [1, 512], strides = [1, 1]} : vector<2x512xf32> to vector<1x512xf32>
    %29 = vector.extract_strided_slice %27 {offsets = [1, 0], sizes = [1, 512], strides = [1, 1]} : vector<2x512xf32> to vector<1x512xf32>
    %30 = arith.divf %28, %29 : vector<1x512xf32>
    %c0_18 = arith.constant 0 : index
    %c0_19 = arith.constant 0 : index
    %c0_20 = arith.constant 0 : index
    %31 = vector.load %arg7[%c0_18, %c0_19, %c0_20] : memref<1x1x512xf32, #tpu.memory_space<vmem>>, vector<1x1x512xf32>
    %32 = vector.shape_cast %31 : vector<1x1x512xf32> to vector<1x512xf32>
    %33 = vector.shape_cast %30 : vector<1x512xf32> to vector<1x1x512xf32>
    tpu.vector_store %arg7[%c0_18, %c0_19, %c0_20], %33 {strides = array<i32>} : memref<1x1x512xf32, #tpu.memory_space<vmem>>, vector<1x1x512xf32>,
    return
  }
  func.func @transform_0(%arg0: i32, %arg1: i32) -> (i32, i32, i32) {
    %c0_i32 = arith.constant 0 : i32
    %c0_i32_0 = arith.constant 0 : i32
    return %arg0, %c0_i32, %arg1 : i32, i32, i32
  }
  func.func @transform_1(%arg0: i32, %arg1: i32) -> (i32, i32) {
    %c0_i32 = arith.constant 0 : i32
    %c0_i32_0 = arith.constant 0 : i32
    %c0_i32_1 = arith.constant 0 : i32
    return %c0_i32, %c0_i32_0 : i32, i32
  }
  func.func @transform_2(%arg0: i32, %arg1: i32) -> (i32, i32) {
    %c0_i32 = arith.constant 0 : i32
    %c0_i32_0 = arith.constant 0 : i32
    %c0_i32_1 = arith.constant 0 : i32
    return %c0_i32, %c0_i32_0 : i32, i32
  }
  func.func @transform_3(%arg0: i32, %arg1: i32) -> (i32, i32) {
    %c0_i32 = arith.constant 0 : i32
    %c0_i32_0 = arith.constant 0 : i32
    %c0_i32_1 = arith.constant 0 : i32
    return %c0_i32, %c0_i32_0 : i32, i32
  }
  func.func @transform_4(%arg0: i32, %arg1: i32) -> (i32, i32, i32) {
    %c0_i32 = arith.constant 0 : i32
    %c0_i32_0 = arith.constant 0 : i32
    return %arg0, %c0_i32, %arg1 : i32, i32, i32
  }
  func.func @transform_5(%arg0: i32, %arg1: i32) -> (i32, i32, i32) {
    %c0_i32 = arith.constant 0 : i32
    %c0_i32_0 = arith.constant 0 : i32
    return %arg0, %c0_i32, %arg1 : i32, i32, i32
  }
}

</mosaic_0001>

<llo_original>
// kernel: tpu_custom_call.1
$region0: #{tpu_custom_call.1}
  #allocation0 [shape = 'u32[]', space=smem, size = 0x4, offset = 0x4, fixed_abs, tag = 'smem constant byte address 0x4 - core index']
  #allocation1 [shape = 'u32[144,128]{1,0:T(1,128)}', space=vmem, size = 0x12000, scoped, tag = 'internal scratch']
  %s0 = inlined_call_operand.hbm [shape: f32[2,256,512], index: 0, kind: input, shape index: {}]
  %s1 = inlined_call_operand.vmem [shape: f32[4,256], index: 1, kind: input, shape index: {}]
  %s2 = inlined_call_operand.vmem [shape: f32[256,4], index: 2, kind: input, shape index: {}]
  %s3 = inlined_call_operand.vmem [shape: f32[2,256], index: 3, kind: input, shape index: {}]
  %s4 = inlined_call_operand.hbm [shape: f32[2,256,512], index: 4, kind: output, shape index: {0}]
  %s5 = inlined_call_operand.hbm [shape: f32[2,1,512], index: 5, kind: output, shape index: {1}]
  %6 = xla_tuple %s4, %s5
  %s7 = sld [smem:[#allocation0]]
  $region61: #{tpu_custom_call.1} parent=0
    _
  %s9 = ssub.s32 1, %s7
  %s10 = scalar_select 0, %s9, %s7
  $region1: #{tpu_custom_call.1} parent=0
    #allocation2 [shape = 'u8[1048576]{0}', space=vmem, size = 0x100000, scoped, tag = 'input window, operand 0']
    #allocation3 [shape = 's32[2]{0}', space=sflag, size = 0x8, scoped, tag = 'scoped memory for tpu_custom_call.1']
    #allocation4 [shape = 's32[2]{0}', space=sflag, size = 0x8, scoped, tag = 'scoped memory for tpu_custom_call.1']
    #allocation5 [shape = 'u8[1048576]{0}', space=vmem, size = 0x100000, scoped, tag = 'output window, operand 0']
    #allocation6 [shape = 'u8[4096]{0}', space=vmem, size = 0x1000, scoped, tag = 'output window, operand 1']
    #allocation7 [shape = 's32[2]{0}', space=sflag, size = 0x8, scoped, tag = 'scoped memory for tpu_custom_call.1']
    %11 = vsyncpa [#allocation3], 0
    %s12 = scalar_lea.sflag [#allocation3], 1
    %13 = vsyncpa %s12, 0
    %14 = vsyncpa [#allocation4], 0
    %s15 = scalar_lea.sflag [#allocation4], 1
    %16 = vsyncpa %s15, 0
    %17 = vsyncpa [#allocation7], 0
    %s18 = scalar_lea.sflag [#allocation7], 1
    %19 = vsyncpa %s18, 0
    loop: start=0, step=1, limit=4
    $region2: #{tpu_custom_call.1} parent=1 // loop_pre_header
      _
    $region3: #{tpu_custom_call.1} parent=1 // loop_header
      %s21 = sphi 0, %s25
      %p22 = scmp.ge.s32.totalorder %s21, 4
      %s28 = sphi 0, %s40
      %s29 = sphi 0, %s36
      %s30 = sphi 0, %s28
      %s31 = sphi 0, %s29
      %s32 = sphi 0, %s30
      %s33 = sphi 0, %s31
      %s45 = sphi 0, %s47
      %s48 = sphi 0, %s45
      %s49 = sphi 0, %s48
      %s65 = sphi 0, %s49
      %s69 = sphi 0, %s69
      %s71 = sphi 0, %s69
      %s72 = sphi 0, %s71
      %s86 = sphi 0, %s72
      %s90 = sphi 0, %s90
      %s92 = sphi 0, %s90
      %s93 = sphi 0, %s92
      %s107 = sphi 0, %s93
      %s111 = sphi 0, %s111
      %s113 = sphi 0, %s111
      %s114 = sphi 0, %s113
      %s128 = sphi 0, %s114
      %s136 = sphi 0, %s138
      %s139 = sphi 0, %s136
      %s140 = sphi 0, %s139
      %s156 = sphi 0, %s140
      %s164 = sphi 0, %s166
      %s167 = sphi 0, %s164
      %s168 = sphi 0, %s167
      %s184 = sphi 0, %s168
    $region4: #{tpu_custom_call.1} parent=1 // loop_header_branch
      %24 = sbr.rel (%p22) target = $region8
    $region5: #{tpu_custom_call.1} parent=1 // loop_body
      %s26 = ssub.s32 %s21, 1
      %s27 = ssub.s32 %s21, 2
      %s34 = sadd.s32 1, %s29
      %p35 = scmp.ge.s32.totalorder %s34, 1
      %s36 = scalar_select %p35, 0, %s34
      %s37 = sadd.s32 1, %s28
      %s38 = scalar_select %p35, %s37, %s28
      %p39 = scmp.ge.s32.totalorder %s38, 2
      %s40 = scalar_select %p39, 0, %s38
      %s41 = ssub.s32 %s28, %s40
      %s42 = ssub.s32 %s29, %s36
      %s43 = sor.u32 %s41, %s42
      %p44 = scmp.eq.s32.totalorder %s43, 0
      %s46 = sadd.s32 %s45, 1
      %s47 = scalar_select %p44, %s45, %s46
      %p50 = pneg %p44
      %p51 = scmp.eq.s32.totalorder %s21, 1
      %p52 = por %p50, %p51
      %p53 = scmp.ne.s32.totalorder %s45, %s48
      %p54 = scmp.eq.s32.totalorder %s21, 0
      %p55 = por %p53, %p54
      %p56 = scmp.ne.s32.totalorder %s45, %s48
      %p57 = scmp.eq.s32.totalorder %s26, 1
      %p58 = por %p56, %p57
      %p59 = scmp.ne.s32.totalorder %s48, %s49
      %p60 = scmp.eq.s32.totalorder %s26, 0
      %p61 = por %p59, %p60
      %p62 = scmp.ne.s32.totalorder %s48, %s49
      %p63 = scmp.eq.s32.totalorder %s27, 1
      %p64 = por %p62, %p63
      %p66 = scmp.ne.s32.totalorder %s49, %s65
      %p67 = scmp.eq.s32.totalorder %s27, 0
      %p68 = por %p66, %p67
      %s70 = sadd.s32 %s69, 1
      %p73 = scmp.eq.s32.totalorder %s21, 1
      %p74 = scmp.ne.s32.totalorder %s69, %s71
      %p75 = scmp.eq.s32.totalorder %s21, 0
      %p76 = por %p74, %p75
      %p77 = scmp.ne.s32.totalorder %s69, %s71
      %p78 = scmp.eq.s32.totalorder %s26, 1
      %p79 = por %p77, %p78
      %p80 = scmp.ne.s32.totalorder %s71, %s72
      %p81 = scmp.eq.s32.totalorder %s26, 0
      %p82 = por %p80, %p81
      %p83 = scmp.ne.s32.totalorder %s71, %s72
      %p84 = scmp.eq.s32.totalorder %s27, 1
      %p85 = por %p83, %p84
      %p87 = scmp.ne.s32.totalorder %s72, %s86
      %p88 = scmp.eq.s32.totalorder %s27, 0
      %p89 = por %p87, %p88
      %s91 = sadd.s32 %s90, 1
      %p94 = scmp.eq.s32.totalorder %s21, 1
      %p95 = scmp.ne.s32.totalorder %s90, %s92
      %p96 = scmp.eq.s32.totalorder %s21, 0
      %p97 = por %p95, %p96
      %p98 = scmp.ne.s32.totalorder %s90, %s92
      %p99 = scmp.eq.s32.totalorder %s26, 1
      %p100 = por %p98, %p99
      %p101 = scmp.ne.s32.totalorder %s92, %s93
      %p102 = scmp.eq.s32.totalorder %s26, 0
      %p103 = por %p101, %p102
      %p104 = scmp.ne.s32.totalorder %s92, %s93
      %p105 = scmp.eq.s32.totalorder %s27, 1
      %p106 = por %p104, %p105
      %p108 = scmp.ne.s32.totalorder %s93, %s107
      %p109 = scmp.eq.s32.totalorder %s27, 0
      %p110 = por %p108, %p109
      %s112 = sadd.s32 %s111, 1
      %p115 = scmp.eq.s32.totalorder %s21, 1
      %p116 = scmp.ne.s32.totalorder %s111, %s113
      %p117 = scmp.eq.s32.totalorder %s21, 0
      %p118 = por %p116, %p117
      %p119 = scmp.ne.s32.totalorder %s111, %s113
      %p120 = scmp.eq.s32.totalorder %s26, 1
      %p121 = por %p119, %p120
      %p122 = scmp.ne.s32.totalorder %s113, %s114
      %p123 = scmp.eq.s32.totalorder %s26, 0
      %p124 = por %p122, %p123
      %p125 = scmp.ne.s32.totalorder %s113, %s114
      %p126 = scmp.eq.s32.totalorder %s27, 1
      %p127 = por %p125, %p126
      %p129 = scmp.ne.s32.totalorder %s114, %s128
      %p130 = scmp.eq.s32.totalorder %s27, 0
      %p131 = por %p129, %p130
      %s132 = ssub.s32 %s28, %s40
      %s133 = ssub.s32 %s29, %s36
      %s134 = sor.u32 %s132, %s133
      %p135 = scmp.eq.s32.totalorder %s134, 0
      %s137 = sadd.s32 %s136, 1
      %s138 = scalar_select %p135, %s136, %s137
      %p141 = pneg %p135
      %p142 = scmp.eq.s32.totalorder %s21, 1
      %p143 = por %p141, %p142
      %p144 = scmp.ne.s32.totalorder %s136, %s139
      %p145 = scmp.eq.s32.totalorder %s21, 0
      %p146 = por %p144, %p145
      %p147 = scmp.ne.s32.totalorder %s136, %s139
      %p148 = scmp.eq.s32.totalorder %s26, 1
      %p149 = por %p147, %p148
      %p150 = scmp.ne.s32.totalorder %s139, %s140
      %p151 = scmp.eq.s32.totalorder %s26, 0
      %p152 = por %p150, %p151
      %p153 = scmp.ne.s32.totalorder %s139, %s140
      %p154 = scmp.eq.s32.totalorder %s27, 1
      %p155 = por %p153, %p154
      %p157 = scmp.ne.s32.totalorder %s140, %s156
      %p158 = scmp.eq.s32.totalorder %s27, 0
      %p159 = por %p157, %p158
      %s160 = ssub.s32 %s28, %s40
      %s161 = ssub.s32 %s29, %s36
      %s162 = sor.u32 %s160, %s161
      %p163 = scmp.eq.s32.totalorder %s162, 0
      %s165 = sadd.s32 %s164, 1
      %s166 = scalar_select %p163, %s164, %s165
      %p169 = pneg %p163
      %p170 = scmp.eq.s32.totalorder %s21, 1
      %p171 = por %p169, %p170
      %p172 = scmp.ne.s32.totalorder %s164, %s167
      %p173 = scmp.eq.s32.totalorder %s21, 0
      %p174 = por %p172, %p173
      %p175 = scmp.ne.s32.totalorder %s164, %s167
      %p176 = scmp.eq.s32.totalorder %s26, 1
      %p177 = por %p175, %p176
      %p178 = scmp.ne.s32.totalorder %s167, %s168
      %p179 = scmp.eq.s32.totalorder %s26, 0
      %p180 = por %p178, %p179
      %p181 = scmp.ne.s32.totalorder %s167, %s168
      %p182 = scmp.eq.s32.totalorder %s27, 1
      %p183 = por %p181, %p182
      %p185 = scmp.ne.s32.totalorder %s168, %s184
      %p186 = scmp.eq.s32.totalorder %s27, 0
      %p187 = por %p185, %p186
      %p188 = scmp.le.s32.totalorder 1, %s21
      %p189 = scmp.lt.s32.totalorder %s21, 3
      %p190 = pnand %p188, %p189
      %p191 = pneg %p190
      // Predicated region
      $region9: #{tpu_custom_call.1} parent=5 // pred_check
        _
      $region10: #{tpu_custom_call.1} parent=5 // pred_check_branch
        %193 = sbr.rel (%p190) target = $region12
      $region11: #{tpu_custom_call.1} parent=5 // pred_region
        %s194 = ssub.s32 %s21, 1
        // Predicated region
        $region13: #{tpu_custom_call.1} parent=11 // pred_check
          %p195 = pneg %p82
        $region14: #{tpu_custom_call.1} parent=11 // pred_check_branch
          %197 = sbr.rel (%p195) target = $region16
        $region15: #{tpu_custom_call.1} parent=11 // pred_region
          _
        $region16: #{tpu_custom_call.1} parent=11 // pred_fallthru
          _
        // Predicated region
        $region17: #{tpu_custom_call.1} parent=11 // pred_check
          %p198 = pneg %p103
        $region18: #{tpu_custom_call.1} parent=11 // pred_check_branch
          %200 = sbr.rel (%p198) target = $region20
        $region19: #{tpu_custom_call.1} parent=11 // pred_region
          _
        $region20: #{tpu_custom_call.1} parent=11 // pred_fallthru
          _
        // Predicated region
        $region21: #{tpu_custom_call.1} parent=11 // pred_check
          %p201 = pneg %p124
        $region22: #{tpu_custom_call.1} parent=11 // pred_check_branch
          %203 = sbr.rel (%p201) target = $region24
        $region23: #{tpu_custom_call.1} parent=11 // pred_region
          _
        $region24: #{tpu_custom_call.1} parent=11 // pred_fallthru
          _
      $region12: #{tpu_custom_call.1} parent=5 // pred_fallthru
        _
      %p204 = scmp.lt.s32.totalorder %s21, 2
      // Predicated region
      $region25: #{tpu_custom_call.1} parent=5 // pred_check
        %p205 = pneg %p204
      $region26: #{tpu_custom_call.1} parent=5 // pred_check_branch
        %207 = sbr.rel (%p205) target = $region28
      $region27: #{tpu_custom_call.1} parent=5 // pred_region
        // Predicated region
        $region29: #{tpu_custom_call.1} parent=27 // pred_check
          %p208 = pneg %p55
        $region30: #{tpu_custom_call.1} parent=27 // pred_check_branch
          %210 = sbr.rel (%p208) target = $region32
        $region31: #{tpu_custom_call.1} parent=27 // pred_region
          %s211 = sand.u32 %s45, 1
          %s212 = scalar_lea.sflag [#allocation3], %s211
          %s213 = sand.u32 %s45, 1
          %s214 = smul.addr %s213, 1024
          %s215 = scalar_lea.vmem [#allocation2], %s214
          %s216 = smul.u32 4, %s29
          %s218 = ssub.s32 16384, 16384
          %219 = vsyncadd %s212, %s218
          %s220 = smul.addr %s28, 128
          %s221 = sadd.s32 %s216, %s220
          %s222 = smul.addr %s221, 128
          %s223 = scalar_lea.hbm %s0, %s222
          %s224 = sshll.u32 %s215, 4
          %s225 = int_to_ptr.vmem [resolvable:$true] %s224
          %230 = dma.hbm_to_vmem [thread:$0]  %s223, 16384, %s225, %s212, 512, 512, 32
        $region32: #{tpu_custom_call.1} parent=27 // pred_fallthru
          _
      $region28: #{tpu_custom_call.1} parent=5 // pred_fallthru
        _
      %p231 = scmp.le.s32.totalorder 1, %s21
      %p232 = scmp.lt.s32.totalorder %s21, 3
      %p233 = pnand %p231, %p232
      %p234 = pneg %p233
      // Predicated region
      $region33: #{tpu_custom_call.1} parent=5 // pred_check
        _
      $region34: #{tpu_custom_call.1} parent=5 // pred_check_branch
        %236 = sbr.rel (%p233) target = $region36
      $region35: #{tpu_custom_call.1} parent=5 // pred_region
        %s237 = ssub.s32 %s21, 1
        %s238 = sand.u32 %s48, 1
        %s239 = scalar_lea.sflag [#allocation3], %s238
        %s240 = sand.u32 %s48, 1
        %s241 = smul.addr %s240, 1024
        %s242 = scalar_lea.vmem [#allocation2], %s241
        // Predicated region
        $region37: #{tpu_custom_call.1} parent=35 // pred_check
          %p243 = pneg %p61
        $region38: #{tpu_custom_call.1} parent=35 // pred_check_branch
          %245 = sbr.rel (%p243) target = $region40
        $region39: #{tpu_custom_call.1} parent=35 // pred_region
          %246 = dma.done %s239, 16384
        $region40: #{tpu_custom_call.1} parent=35 // pred_fallthru
          _
        %s247 = sand.u32 %s48, 1
        %s248 = scalar_lea.sflag [#allocation3], %s247
        %s249 = sand.u32 %s48, 1
        %s250 = smul.addr %s249, 1024
        %s251 = scalar_lea.vmem [#allocation2], %s250
        %p252 = pneg %p61
        %p253 = pneg %p58
        %p254 = pneg %p82
        %p255 = pneg %p79
        %p256 = pneg %p103
        %p257 = pneg %p100
        %p258 = pneg %p124
        %p259 = pneg %p121
        %p260 = pneg %p152
        %p261 = pneg %p149
        %s262 = sand.u32 %s139, 1
        %s263 = scalar_lea.sflag [#allocation4], %s262
        %s264 = sand.u32 %s139, 1
        %s265 = smul.addr %s264, 1024
        %s266 = scalar_lea.vmem [#allocation5], %s265
        %p267 = pneg %p180
        %p268 = pneg %p177
        %s269 = sand.u32 %s167, 1
        %s270 = scalar_lea.sflag [#allocation7], %s269
        %s271 = sand.u32 %s167, 1
        %s272 = smul.addr %s271, 4
        %s273 = scalar_lea.vmem [#allocation6], %s272
        %s274 = smul.u32 4, %s31
        %s275 = smul.u32 4, %s31
        %s276 = smul.u32 4, %s31
        %v277 = vld [vmem:[%s242] sm:$0xff]
        %v278 = vld [vmem:[%s242 + $0x8] sm:$0xff]
        %v279 = vld [vmem:[%s242 + $0x10] sm:$0xff]
        %v280 = vld [vmem:[%s242 + $0x18] sm:$0xff]
        %v281 = vld [vmem:[%s242 + $0x20] sm:$0xff]
        %v282 = vld [vmem:[%s242 + $0x28] sm:$0xff]
        %v283 = vld [vmem:[%s242 + $0x30] sm:$0xff]
        %v284 = vld [vmem:[%s242 + $0x38] sm:$0xff]
        %v285 = vld [vmem:[%s242 + $0x40] sm:$0xff]
        %v286 = vld [vmem:[%s242 + $0x48] sm:$0xff]
        %v287 = vld [vmem:[%s242 + $0x50] sm:$0xff]
        %v288 = vld [vmem:[%s242 + $0x58] sm:$0xff]
        %v289 = vld [vmem:[%s242 + $0x60] sm:$0xff]
        %v290 = vld [vmem:[%s242 + $0x68] sm:$0xff]
        %v291 = vld [vmem:[%s242 + $0x70] sm:$0xff]
        %v292 = vld [vmem:[%s242 + $0x78] sm:$0xff]
        %v293 = vld [vmem:[%s242 + $0x80] sm:$0xff]
        %v294 = vld [vmem:[%s242 + $0x88] sm:$0xff]
        %v295 = vld [vmem:[%s242 + $0x90] sm:$0xff]
        %v296 = vld [vmem:[%s242 + $0x98] sm:$0xff]
        %v297 = vld [vmem:[%s242 + $0xa0] sm:$0xff]
        %v298 = vld [vmem:[%s242 + $0xa8] sm:$0xff]
        %v299 = vld [vmem:[%s242 + $0xb0] sm:$0xff]
        %v300 = vld [vmem:[%s242 + $0xb8] sm:$0xff]
        %v301 = vld [vmem:[%s242 + $0xc0] sm:$0xff]
        %v302 = vld [vmem:[%s242 + $0xc8] sm:$0xff]
        %v303 = vld [vmem:[%s242 + $0xd0] sm:$0xff]
        %v304 = vld [vmem:[%s242 + $0xd8] sm:$0xff]
        %v305 = vld [vmem:[%s242 + $0xe0] sm:$0xff]
        %v306 = vld [vmem:[%s242 + $0xe8] sm:$0xff]
        %v307 = vld [vmem:[%s242 + $0xf0] sm:$0xff]
        %v308 = vld [vmem:[%s242 + $0xf8] sm:$0xff]
        %v309 = vld [vmem:[%s242 + $0x100] sm:$0xff]
        %v310 = vld [vmem:[%s242 + $0x108] sm:$0xff]
        %v311 = vld [vmem:[%s242 + $0x110] sm:$0xff]
        %v312 = vld [vmem:[%s242 + $0x118] sm:$0xff]
        %v313 = vld [vmem:[%s242 + $0x120] sm:$0xff]
        %v314 = vld [vmem:[%s242 + $0x128] sm:$0xff]
        %v315 = vld [vmem:[%s242 + $0x130] sm:$0xff]
        %v316 = vld [vmem:[%s242 + $0x138] sm:$0xff]
        %v317 = vld [vmem:[%s242 + $0x140] sm:$0xff]
        %v318 = vld [vmem:[%s242 + $0x148] sm:$0xff]
        %v319 = vld [vmem:[%s242 + $0x150] sm:$0xff]
        %v320 = vld [vmem:[%s242 + $0x158] sm:$0xff]
        %v321 = vld [vmem:[%s242 + $0x160] sm:$0xff]
        %v322 = vld [vmem:[%s242 + $0x168] sm:$0xff]
        %v323 = vld [vmem:[%s242 + $0x170] sm:$0xff]
        %v324 = vld [vmem:[%s242 + $0x178] sm:$0xff]
        %v325 = vld [vmem:[%s242 + $0x180] sm:$0xff]
        %v326 = vld [vmem:[%s242 + $0x188] sm:$0xff]
        %v327 = vld [vmem:[%s242 + $0x190] sm:$0xff]
        %v328 = vld [vmem:[%s242 + $0x198] sm:$0xff]
        %v329 = vld [vmem:[%s242 + $0x1a0] sm:$0xff]
        %v330 = vld [vmem:[%s242 + $0x1a8] sm:$0xff]
        %v331 = vld [vmem:[%s242 + $0x1b0] sm:$0xff]
        %v332 = vld [vmem:[%s242 + $0x1b8] sm:$0xff]
        %v333 = vld [vmem:[%s242 + $0x1c0] sm:$0xff]
        %v334 = vld [vmem:[%s242 + $0x1c8] sm:$0xff]
        %v335 = vld [vmem:[%s242 + $0x1d0] sm:$0xff]
        %v336 = vld [vmem:[%s242 + $0x1d8] sm:$0xff]
        %v337 = vld [vmem:[%s242 + $0x1e0] sm:$0xff]
        %v338 = vld [vmem:[%s242 + $0x1e8] sm:$0xff]
        %v339 = vld [vmem:[%s242 + $0x1f0] sm:$0xff]
        %v340 = vld [vmem:[%s242 + $0x1f8] sm:$0xff]
        %v341 = vld [vmem:[%s242 + $0x200] sm:$0xff]
        %v342 = vld [vmem:[%s242 + $0x208] sm:$0xff]
        %v343 = vld [vmem:[%s242 + $0x210] sm:$0xff]
        %v344 = vld [vmem:[%s242 + $0x218] sm:$0xff]
        %v345 = vld [vmem:[%s242 + $0x220] sm:$0xff]
        %v346 = vld [vmem:[%s242 + $0x228] sm:$0xff]
        %v347 = vld [vmem:[%s242 + $0x230] sm:$0xff]
        %v348 = vld [vmem:[%s242 + $0x238] sm:$0xff]
        %v349 = vld [vmem:[%s242 + $0x240] sm:$0xff]
        %v350 = vld [vmem:[%s242 + $0x248] sm:$0xff]
        %v351 = vld [vmem:[%s242 + $0x250] sm:$0xff]
        %v352 = vld [vmem:[%s242 + $0x258] sm:$0xff]
        %v353 = vld [vmem:[%s242 + $0x260] sm:$0xff]
        %v354 = vld [vmem:[%s242 + $0x268] sm:$0xff]
        %v355 = vld [vmem:[%s242 + $0x270] sm:$0xff]
        %v356 = vld [vmem:[%s242 + $0x278] sm:$0xff]
        %v357 = vld [vmem:[%s242 + $0x280] sm:$0xff]
        %v358 = vld [vmem:[%s242 + $0x288] sm:$0xff]
        %v359 = vld [vmem:[%s242 + $0x290] sm:$0xff]
        %v360 = vld [vmem:[%s242 + $0x298] sm:$0xff]
        %v361 = vld [vmem:[%s242 + $0x2a0] sm:$0xff]
        %v362 = vld [vmem:[%s242 + $0x2a8] sm:$0xff]
        %v363 = vld [vmem:[%s242 + $0x2b0] sm:$0xff]
        %v364 = vld [vmem:[%s242 + $0x2b8] sm:$0xff]
        %v365 = vld [vmem:[%s242 + $0x2c0] sm:$0xff]
        %v366 = vld [vmem:[%s242 + $0x2c8] sm:$0xff]
        %v367 = vld [vmem:[%s242 + $0x2d0] sm:$0xff]
        %v368 = vld [vmem:[%s242 + $0x2d8] sm:$0xff]
        %v369 = vld [vmem:[%s242 + $0x2e0] sm:$0xff]
        %v370 = vld [vmem:[%s242 + $0x2e8] sm:$0xff]
        %v371 = vld [vmem:[%s242 + $0x2f0] sm:$0xff]
        %v372 = vld [vmem:[%s242 + $0x2f8] sm:$0xff]
        %v373 = vld [vmem:[%s242 + $0x300] sm:$0xff]
        %v374 = vld [vmem:[%s242 + $0x308] sm:$0xff]
        %v375 = vld [vmem:[%s242 + $0x310] sm:$0xff]
        %v376 = vld [vmem:[%s242 + $0x318] sm:$0xff]
        %v377 = vld [vmem:[%s242 + $0x320] sm:$0xff]
        %v378 = vld [vmem:[%s242 + $0x328] sm:$0xff]
        %v379 = vld [vmem:[%s242 + $0x330] sm:$0xff]
        %v380 = vld [vmem:[%s242 + $0x338] sm:$0xff]
        %v381 = vld [vmem:[%s242 + $0x340] sm:$0xff]
        %v382 = vld [vmem:[%s242 + $0x348] sm:$0xff]
        %v383 = vld [vmem:[%s242 + $0x350] sm:$0xff]
        %v384 = vld [vmem:[%s242 + $0x358] sm:$0xff]
        %v385 = vld [vmem:[%s242 + $0x360] sm:$0xff]
        %v386 = vld [vmem:[%s242 + $0x368] sm:$0xff]
        %v387 = vld [vmem:[%s242 + $0x370] sm:$0xff]
        %v388 = vld [vmem:[%s242 + $0x378] sm:$0xff]
        %v389 = vld [vmem:[%s242 + $0x380] sm:$0xff]
        %v390 = vld [vmem:[%s242 + $0x388] sm:$0xff]
        %v391 = vld [vmem:[%s242 + $0x390] sm:$0xff]
        %v392 = vld [vmem:[%s242 + $0x398] sm:$0xff]
        %v393 = vld [vmem:[%s242 + $0x3a0] sm:$0xff]
        %v394 = vld [vmem:[%s242 + $0x3a8] sm:$0xff]
        %v395 = vld [vmem:[%s242 + $0x3b0] sm:$0xff]
        %v396 = vld [vmem:[%s242 + $0x3b8] sm:$0xff]
        %v397 = vld [vmem:[%s242 + $0x3c0] sm:$0xff]
        %v398 = vld [vmem:[%s242 + $0x3c8] sm:$0xff]
        %v399 = vld [vmem:[%s242 + $0x3d0] sm:$0xff]
        %v400 = vld [vmem:[%s242 + $0x3d8] sm:$0xff]
        %v401 = vld [vmem:[%s242 + $0x3e0] sm:$0xff]
        %v402 = vld [vmem:[%s242 + $0x3e8] sm:$0xff]
        %v403 = vld [vmem:[%s242 + $0x3f0] sm:$0xff]
        %v404 = vld [vmem:[%s242 + $0x3f8] sm:$0xff]
        %v405 = vld [vmem:[%s1] sm:$0xff]
        %v406 = vld [vmem:[%s2] sm:$0xff]
        %v407 = vld [vmem:[%s2 + $0x8] sm:$0xff]
        %v408 = vld [vmem:[%s2 + $0x10] sm:$0xff]
        %v409 = vld [vmem:[%s2 + $0x18] sm:$0xff]
        %v410 = vld [vmem:[%s2 + $0x20] sm:$0xff]
        %v411 = vld [vmem:[%s2 + $0x28] sm:$0xff]
        %v412 = vld [vmem:[%s2 + $0x30] sm:$0xff]
        %v413 = vld [vmem:[%s2 + $0x38] sm:$0xff]
        %v414 = vld [vmem:[%s2 + $0x40] sm:$0xff]
        %v415 = vld [vmem:[%s2 + $0x48] sm:$0xff]
        %v416 = vld [vmem:[%s2 + $0x50] sm:$0xff]
        %v417 = vld [vmem:[%s2 + $0x58] sm:$0xff]
        %v418 = vld [vmem:[%s2 + $0x60] sm:$0xff]
        %v419 = vld [vmem:[%s2 + $0x68] sm:$0xff]
        %v420 = vld [vmem:[%s2 + $0x70] sm:$0xff]
        %v421 = vld [vmem:[%s2 + $0x78] sm:$0xff]
        %v422 = vld [vmem:[%s2 + $0x80] sm:$0xff]
        %v423 = vld [vmem:[%s2 + $0x88] sm:$0xff]
        %v424 = vld [vmem:[%s2 + $0x90] sm:$0xff]
        %v425 = vld [vmem:[%s2 + $0x98] sm:$0xff]
        %v426 = vld [vmem:[%s2 + $0xa0] sm:$0xff]
        %v427 = vld [vmem:[%s2 + $0xa8] sm:$0xff]
        %v428 = vld [vmem:[%s2 + $0xb0] sm:$0xff]
        %v429 = vld [vmem:[%s2 + $0xb8] sm:$0xff]
        %v430 = vld [vmem:[%s2 + $0xc0] sm:$0xff]
        %v431 = vld [vmem:[%s2 + $0xc8] sm:$0xff]
        %v432 = vld [vmem:[%s2 + $0xd0] sm:$0xff]
        %v433 = vld [vmem:[%s2 + $0xd8] sm:$0xff]
        %v434 = vld [vmem:[%s2 + $0xe0] sm:$0xff]
        %v435 = vld [vmem:[%s2 + $0xe8] sm:$0xff]
        %v436 = vld [vmem:[%s2 + $0xf0] sm:$0xff]
        %v437 = vld [vmem:[%s2 + $0xf8] sm:$0xff]
        %v438 = vld [vmem:[%s3] sm:$0xf]
        %v440 = vcombine.high %v405, %v405
        %442 = vmatprep.subr.mxu0 %v278
        %443 = vmatpush1.msra.mxu0 %v277
        %444 = vmatprep.subr.mxu0 %v282
        %445 = vmatpush1.msra.mxu0 %v281
        %446 = vmatprep.subr.mxu0 %v286
        %447 = vmatpush1.msra.mxu0 %v285
        %448 = vmatprep.subr.mxu0 %v290
        %449 = vmatpush1.msra.mxu0 %v289
        %450 = vmatprep.subr.mxu0 %v294
        %451 = vmatpush1.msra.mxu0 %v293
        %452 = vmatprep.subr.mxu0 %v298
        %453 = vmatpush1.msra.mxu0 %v297
        %454 = vmatprep.subr.mxu0 %v302
        %455 = vmatpush1.msra.mxu0 %v301
        %456 = vmatprep.subr.mxu0 %v306
        %457 = vmatpush1.msra.mxu0 %v305
        %458 = vmatprep.subr.mxu0 %v310
        %459 = vmatpush1.msra.mxu0 %v309
        %460 = vmatprep.subr.mxu0 %v314
        %461 = vmatpush1.msra.mxu0 %v313
        %462 = vmatprep.subr.mxu0 %v318
        %463 = vmatpush1.msra.mxu0 %v317
        %464 = vmatprep.subr.mxu0 %v322
        %465 = vmatpush1.msra.mxu0 %v321
        %466 = vmatprep.subr.mxu0 %v326
        %467 = vmatpush1.msra.mxu0 %v325
        %468 = vmatprep.subr.mxu0 %v330
        %469 = vmatpush1.msra.mxu0 %v329
        %470 = vmatprep.subr.mxu0 %v334
        %471 = vmatpush1.msra.mxu0 %v333
        %472 = vmatprep.subr.mxu0 %v338
        %473 = vmatpush1.msra.mxu0 %v337
        %474 = vmatprep.subr.mxu0 %v342
        %475 = vmatpush1.msra.mxu0 %v341
        %476 = vmatprep.subr.mxu0 %v346
        %477 = vmatpush1.msra.mxu0 %v345
        %478 = vmatprep.subr.mxu0 %v350
        %479 = vmatpush1.msra.mxu0 %v349
        %480 = vmatprep.subr.mxu0 %v354
        %481 = vmatpush1.msra.mxu0 %v353
        %482 = vmatprep.subr.mxu0 %v358
        %483 = vmatpush1.msra.mxu0 %v357
        %484 = vmatprep.subr.mxu0 %v362
        %485 = vmatpush1.msra.mxu0 %v361
        %486 = vmatprep.subr.mxu0 %v366
        %487 = vmatpush1.msra.mxu0 %v365
        %488 = vmatprep.subr.mxu0 %v370
        %489 = vmatpush1.msra.mxu0 %v369
        %490 = vmatprep.subr.mxu0 %v374
        %491 = vmatpush1.msra.mxu0 %v373
        %492 = vmatprep.subr.mxu0 %v378
        %493 = vmatpush1.msra.mxu0 %v377
        %494 = vmatprep.subr.mxu0 %v382
        %495 = vmatpush1.msra.mxu0 %v381
        %496 = vmatprep.subr.mxu0 %v386
        %497 = vmatpush1.msra.mxu0 %v385
        %498 = vmatprep.subr.mxu0 %v390
        %499 = vmatpush1.msra.mxu0 %v389
        %500 = vmatprep.subr.mxu0 %v394
        %501 = vmatpush1.msra.mxu0 %v393
        %502 = vmatprep.subr.mxu0 %v398
        %503 = vmatpush1.msra.mxu0 %v397
        %504 = vmatprep.subr.mxu0 %v402
        %505 = vmatpush1.msra.mxu0 %v401
        %506 = vmatprep.mubr.f32.mxu0 %v440
        %507 = vmatmul.mubr.f32.gmra.mrb[0].mxu0 %v405
        %v508 = vpop.f32.mrb[0].mxu0
        %v509 = vadd.f32 0.0, %v508
        %v510 = vpop.f32.mrb[0].mxu0
        %v511 = vadd.f32 0.0, %v510
        %512 = vdwg.mxu0
        %513 = vmatprep.subr.mxu0 %v280
        %514 = vmatpush1.msra.mxu0 %v279
        %515 = vmatprep.subr.mxu0 %v284
        %516 = vmatpush1.msra.mxu0 %v283
        %517 = vmatprep.subr.mxu0 %v288
        %518 = vmatpush1.msra.mxu0 %v287
        %519 = vmatprep.subr.mxu0 %v292
        %520 = vmatpush1.msra.mxu0 %v291
        %521 = vmatprep.subr.mxu0 %v296
        %522 = vmatpush1.msra.mxu0 %v295
        %523 = vmatprep.subr.mxu0 %v300
        %524 = vmatpush1.msra.mxu0 %v299
        %525 = vmatprep.subr.mxu0 %v304
        %526 = vmatpush1.msra.mxu0 %v303
        %527 = vmatprep.subr.mxu0 %v308
        %528 = vmatpush1.msra.mxu0 %v307
        %529 = vmatprep.subr.mxu0 %v312
        %530 = vmatpush1.msra.mxu0 %v311
        %531 = vmatprep.subr.mxu0 %v316
        %532 = vmatpush1.msra.mxu0 %v315
        %533 = vmatprep.subr.mxu0 %v320
        %534 = vmatpush1.msra.mxu0 %v319
        %535 = vmatprep.subr.mxu0 %v324
        %536 = vmatpush1.msra.mxu0 %v323
        %537 = vmatprep.subr.mxu0 %v328
        %538 = vmatpush1.msra.mxu0 %v327
        %539 = vmatprep.subr.mxu0 %v332
        %540 = vmatpush1.msra.mxu0 %v331
        %541 = vmatprep.subr.mxu0 %v336
        %542 = vmatpush1.msra.mxu0 %v335
        %543 = vmatprep.subr.mxu0 %v340
        %544 = vmatpush1.msra.mxu0 %v339
        %545 = vmatprep.subr.mxu0 %v344
        %546 = vmatpush1.msra.mxu0 %v343
        %547 = vmatprep.subr.mxu0 %v348
        %548 = vmatpush1.msra.mxu0 %v347
        %549 = vmatprep.subr.mxu0 %v352
        %550 = vmatpush1.msra.mxu0 %v351
        %551 = vmatprep.subr.mxu0 %v356
        %552 = vmatpush1.msra.mxu0 %v355
        %553 = vmatprep.subr.mxu0 %v360
        %554 = vmatpush1.msra.mxu0 %v359
        %555 = vmatprep.subr.mxu0 %v364
        %556 = vmatpush1.msra.mxu0 %v363
        %557 = vmatprep.subr.mxu0 %v368
        %558 = vmatpush1.msra.mxu0 %v367
        %559 = vmatprep.subr.mxu0 %v372
        %560 = vmatpush1.msra.mxu0 %v371
        %561 = vmatprep.subr.mxu0 %v376
        %562 = vmatpush1.msra.mxu0 %v375
        %563 = vmatprep.subr.mxu0 %v380
        %564 = vmatpush1.msra.mxu0 %v379
        %565 = vmatprep.subr.mxu0 %v384
        %566 = vmatpush1.msra.mxu0 %v383
        %567 = vmatprep.subr.mxu0 %v388
        %568 = vmatpush1.msra.mxu0 %v387
        %569 = vmatprep.subr.mxu0 %v392
        %570 = vmatpush1.msra.mxu0 %v391
        %571 = vmatprep.subr.mxu0 %v396
        %572 = vmatpush1.msra.mxu0 %v395
        %573 = vmatprep.subr.mxu0 %v400
        %574 = vmatpush1.msra.mxu0 %v399
        %575 = vmatprep.subr.mxu0 %v404
        %576 = vmatpush1.msra.mxu0 %v403
        %577 = vmatprep.mubr.f32.mxu0 %v440
        %578 = vmatmul.mubr.f32.gmra.mrb[0].mxu0 %v405
        %v579 = vpop.f32.mrb[0].mxu0
        %v580 = vadd.f32 0.0, %v579
        %v581 = vpop.f32.mrb[0].mxu0
        %v582 = vadd.f32 0.0, %v581
        %583 = vdwg.mxu0
        %vm584 = vcmask 1043456
        %v585 = vsel %vm584, %v509, 0.0
        %v586 = vrot.slane %v585, 4
        %v587 = vadd.f32 %v585, %v586
        %v588 = vrot.slane %v587, 2
        %v589 = vadd.f32 %v587, %v588
        %v590 = vrot.slane %v589, 1
        %v591 = vadd.f32 %v589, %v590
        %v592 = vsel %vm584, %v511, 0.0
        %v593 = vrot.slane %v592, 4
        %v594 = vadd.f32 %v592, %v593
        %v595 = vrot.slane %v594, 2
        %v596 = vadd.f32 %v594, %v595
        %v597 = vrot.slane %v596, 1
        %v598 = vadd.f32 %v596, %v597
        %v599 = vsel %vm584, %v580, 0.0
        %v600 = vrot.slane %v599, 4
        %v601 = vadd.f32 %v599, %v600
        %v602 = vrot.slane %v601, 2
        %v603 = vadd.f32 %v601, %v602
        %v604 = vrot.slane %v603, 1
        %v605 = vadd.f32 %v603, %v604
        %v606 = vsel %vm584, %v582, 0.0
        %v607 = vrot.slane %v606, 4
        %v608 = vadd.f32 %v606, %v607
        %v609 = vrot.slane %v608, 2
        %v610 = vadd.f32 %v608, %v609
        %v611 = vrot.slane %v610, 1
        %v612 = vadd.f32 %v610, %v611
        %v613 = vrcp.pop 4.0
        %v614 = vmul.f32 %v591, %v613
        %v615 = vmul.f32 %v598, %v613
        %v616 = vmul.f32 %v605, %v613
        %v617 = vmul.f32 %v612, %v613
        %v618 = vsub.f32 %v509, %v614
        %v619 = vsub.f32 %v511, %v615
        %v620 = vsub.f32 %v580, %v616
        %v621 = vsub.f32 %v582, %v617
        %v622 = vmul.f32 %v618, %v618
        %v623 = vmul.f32 %v619, %v619
        %v624 = vmul.f32 %v620, %v620
        %v625 = vmul.f32 %v621, %v621
        %v626 = vsel %vm584, %v622, 0.0
        %v627 = vrot.slane %v626, 4
        %v628 = vadd.f32 %v626, %v627
        %v629 = vrot.slane %v628, 2
        %v630 = vadd.f32 %v628, %v629
        %v631 = vrot.slane %v630, 1
        %v632 = vadd.f32 %v630, %v631
        %v633 = vsel %vm584, %v623, 0.0
        %v634 = vrot.slane %v633, 4
        %v635 = vadd.f32 %v633, %v634
        %v636 = vrot.slane %v635, 2
        %v637 = vadd.f32 %v635, %v636
        %v638 = vrot.slane %v637, 1
        %v639 = vadd.f32 %v637, %v638
        %v640 = vsel %vm584, %v624, 0.0
        %v641 = vrot.slane %v640, 4
        %v642 = vadd.f32 %v640, %v641
        %v643 = vrot.slane %v642, 2
        %v644 = vadd.f32 %v642, %v643
        %v645 = vrot.slane %v644, 1
        %v646 = vadd.f32 %v644, %v645
        %v647 = vsel %vm584, %v625, 0.0
        %v648 = vrot.slane %v647, 4
        %v649 = vadd.f32 %v647, %v648
        %v650 = vrot.slane %v649, 2
        %v651 = vadd.f32 %v649, %v650
        %v652 = vrot.slane %v651, 1
        %v653 = vadd.f32 %v651, %v652
        %v654 = vrsqrt.pop %v632
        %v655 = vrsqrt.pop %v639
        %v656 = vrsqrt.pop %v646
        %v657 = vrsqrt.pop %v653
        %vm658 = vcmask 31744
        %v660 = vsel %vm658, %v406, 0
        %v663 = vsel %vm658, %v407, 0
        %v666 = vsel %vm658, %v408, 0
        %v669 = vsel %vm658, %v409, 0
        %v672 = vsel %vm658, %v410, 0
        %v675 = vsel %vm658, %v411, 0
        %v678 = vsel %vm658, %v412, 0
        %v681 = vsel %vm658, %v413, 0
        %v684 = vsel %vm658, %v414, 0
        %v687 = vsel %vm658, %v415, 0
        %v690 = vsel %vm658, %v416, 0
        %v693 = vsel %vm658, %v417, 0
        %v696 = vsel %vm658, %v418, 0
        %v699 = vsel %vm658, %v419, 0
        %v702 = vsel %vm658, %v420, 0
        %v705 = vsel %vm658, %v421, 0
        %v708 = vsel %vm658, %v422, 0
        %v711 = vsel %vm658, %v423, 0
        %v714 = vsel %vm658, %v424, 0
        %v717 = vsel %vm658, %v425, 0
        %v720 = vsel %vm658, %v426, 0
        %v723 = vsel %vm658, %v427, 0
        %v726 = vsel %vm658, %v428, 0
        %v729 = vsel %vm658, %v429, 0
        %v732 = vsel %vm658, %v430, 0
        %v735 = vsel %vm658, %v431, 0
        %v738 = vsel %vm658, %v432, 0
        %v741 = vsel %vm658, %v433, 0
        %v744 = vsel %vm658, %v434, 0
        %v747 = vsel %vm658, %v435, 0
        %v750 = vsel %vm658, %v436, 0
        %v753 = vsel %vm658, %v437, 0
        %v756 = vsel %vm584, %v509, 0
        %v759 = vsel %vm584, %v511, 0
        %v762 = vsel %vm584, %v580, 0
        %v765 = vsel %vm584, %v582, 0
        %767 = vmatprep.subr.mxu0 %v759
        %768 = vmatpush1.msra.mxu0 %v756
        %769 = vmatprep.subr.mxu0 0.0
        %770 = vmatpush1.msra.mxu0 0.0
        %771 = vmatprep.subr.mxu0 0.0
        %772 = vmatpush1.msra.mxu0 0.0
        %773 = vmatprep.subr.mxu0 0.0
        %774 = vmatpush1.msra.mxu0 0.0
        %775 = vmatprep.subr.mxu0 0.0
        %776 = vmatpush1.msra.mxu0 0.0
        %777 = vmatprep.subr.mxu0 0.0
        %778 = vmatpush1.msra.mxu0 0.0
        %779 = vmatprep.subr.mxu0 0.0
        %780 = vmatpush1.msra.mxu0 0.0
        %781 = vmatprep.subr.mxu0 0.0
        %782 = vmatpush1.msra.mxu0 0.0
        %783 = vmatprep.subr.mxu0 0.0
        %784 = vmatpush1.msra.mxu0 0.0
        %785 = vmatprep.subr.mxu0 0.0
        %786 = vmatpush1.msra.mxu0 0.0
        %787 = vmatprep.subr.mxu0 0.0
        %788 = vmatpush1.msra.mxu0 0.0
        %789 = vmatprep.subr.mxu0 0.0
        %790 = vmatpush1.msra.mxu0 0.0
        %791 = vmatprep.subr.mxu0 0.0
        %792 = vmatpush1.msra.mxu0 0.0
        %793 = vmatprep.subr.mxu0 0.0
        %794 = vmatpush1.msra.mxu0 0.0
        %795 = vmatprep.subr.mxu0 0.0
        %796 = vmatpush1.msra.mxu0 0.0
        %797 = vmatprep.subr.mxu0 0.0
        %798 = vmatpush1.msra.mxu0 0.0
        %799 = vmatprep.subr.mxu0 0.0
        %800 = vmatpush1.msra.mxu0 0.0
        %801 = vmatprep.subr.mxu0 0.0
        %802 = vmatpush1.msra.mxu0 0.0
        %803 = vmatprep.subr.mxu0 0.0
        %804 = vmatpush1.msra.mxu0 0.0
        %805 = vmatprep.subr.mxu0 0.0
        %806 = vmatpush1.msra.mxu0 0.0
        %807 = vmatprep.subr.mxu0 0.0
        %808 = vmatpush1.msra.mxu0 0.0
        %809 = vmatprep.subr.mxu0 0.0
        %810 = vmatpush1.msra.mxu0 0.0
        %811 = vmatprep.subr.mxu0 0.0
        %812 = vmatpush1.msra.mxu0 0.0
        %813 = vmatprep.subr.mxu0 0.0
        %814 = vmatpush1.msra.mxu0 0.0
        %815 = vmatprep.subr.mxu0 0.0
        %816 = vmatpush1.msra.mxu0 0.0
        %817 = vmatprep.subr.mxu0 0.0
        %818 = vmatpush1.msra.mxu0 0.0
        %819 = vmatprep.subr.mxu0 0.0
        %820 = vmatpush1.msra.mxu0 0.0
        %821 = vmatprep.subr.mxu0 0.0
        %822 = vmatpush1.msra.mxu0 0.0
        %823 = vmatprep.subr.mxu0 0.0
        %824 = vmatpush1.msra.mxu0 0.0
        %825 = vmatprep.subr.mxu0 0.0
        %826 = vmatpush1.msra.mxu0 0.0
        %827 = vmatprep.subr.mxu0 0.0
        %828 = vmatpush1.msra.mxu0 0.0
        %829 = vmatprep.subr.mxu0 0.0
        %830 = vmatpush1.msra.mxu0 0.0
        %831 = vmatprep.mubr.f32.mxu0 0.0
        %832 = vmatmul.mubr.f32.gmra.mrb[0].mxu0 %v660
        %v833 = vpop.f32.mrb[0].mxu0
        %v834 = vadd.f32 0.0, %v833
        %v835 = vpop.f32.mrb[0].mxu0
        %v836 = vadd.f32 0.0, %v835
        %837 = vmatprep.mubr.f32.mxu0 0.0
        %838 = vmatmul.mubr.f32.gmra.mrb[0].mxu0 %v663
        %v839 = vpop.f32.mrb[0].mxu0
        %v840 = vadd.f32 0.0, %v839
        %v841 = vpop.f32.mrb[0].mxu0
        %v842 = vadd.f32 0.0, %v841
        %843 = vmatprep.mubr.f32.mxu0 0.0
        %844 = vmatmul.mubr.f32.gmra.mrb[0].mxu0 %v666
        %v845 = vpop.f32.mrb[0].mxu0
        %v846 = vadd.f32 0.0, %v845
        %v847 = vpop.f32.mrb[0].mxu0
        %v848 = vadd.f32 0.0, %v847
        %849 = vmatprep.mubr.f32.mxu0 0.0
        %850 = vmatmul.mubr.f32.gmra.mrb[0].mxu0 %v669
        %v851 = vpop.f32.mrb[0].mxu0
        %v852 = vadd.f32 0.0, %v851
        %v853 = vpop.f32.mrb[0].mxu0
        %v854 = vadd.f32 0.0, %v853
        %855 = vmatprep.mubr.f32.mxu0 0.0
        %856 = vmatmul.mubr.f32.gmra.mrb[0].mxu0 %v672
        %v857 = vpop.f32.mrb[0].mxu0
        %v858 = vadd.f32 0.0, %v857
        %v859 = vpop.f32.mrb[0].mxu0
        %v860 = vadd.f32 0.0, %v859
        %861 = vmatprep.mubr.f32.mxu0 0.0
        %862 = vmatmul.mubr.f32.gmra.mrb[0].mxu0 %v675
        %v863 = vpop.f32.mrb[0].mxu0
        %v864 = vadd.f32 0.0, %v863
        %v865 = vpop.f32.mrb[0].mxu0
        %v866 = vadd.f32 0.0, %v865
        %867 = vmatprep.mubr.f32.mxu0 0.0
        %868 = vmatmul.mubr.f32.gmra.mrb[0].mxu0 %v678
        %v869 = vpop.f32.mrb[0].mxu0
        %v870 = vadd.f32 0.0, %v869
        %v871 = vpop.f32.mrb[0].mxu0
        %v872 = vadd.f32 0.0, %v871
        %873 = vmatprep.mubr.f32.mxu0 0.0
        %874 = vmatmul.mubr.f32.gmra.mrb[0].mxu0 %v681
        %v875 = vpop.f32.mrb[0].mxu0
        %v876 = vadd.f32 0.0, %v875
        %v877 = vpop.f32.mrb[0].mxu0
        %v878 = vadd.f32 0.0, %v877
        %879 = vmatprep.mubr.f32.mxu0 0.0
        %880 = vmatmul.mubr.f32.gmra.mrb[0].mxu0 %v684
        %v881 = vpop.f32.mrb[0].mxu0
        %v882 = vadd.f32 0.0, %v881
        %v883 = vpop.f32.mrb[0].mxu0
        %v884 = vadd.f32 0.0, %v883
        %885 = vmatprep.mubr.f32.mxu0 0.0
        %886 = vmatmul.mubr.f32.gmra.mrb[0].mxu0 %v687
        %v887 = vpop.f32.mrb[0].mxu0
        %v888 = vadd.f32 0.0, %v887
        %v889 = vpop.f32.mrb[0].mxu0
        %v890 = vadd.f32 0.0, %v889
        %891 = vmatprep.mubr.f32.mxu0 0.0
        %892 = vmatmul.mubr.f32.gmra.mrb[0].mxu0 %v690
        %v893 = vpop.f32.mrb[0].mxu0
        %v894 = vadd.f32 0.0, %v893
        %v895 = vpop.f32.mrb[0].mxu0
        %v896 = vadd.f32 0.0, %v895
        %897 = vmatprep.mubr.f32.mxu0 0.0
        %898 = vmatmul.mubr.f32.gmra.mrb[0].mxu0 %v693
        %v899 = vpop.f32.mrb[0].mxu0
        %v900 = vadd.f32 0.0, %v899
        %v901 = vpop.f32.mrb[0].mxu0
        %v902 = vadd.f32 0.0, %v901
        %903 = vmatprep.mubr.f32.mxu0 0.0
        %904 = vmatmul.mubr.f32.gmra.mrb[0].mxu0 %v696
        %v905 = vpop.f32.mrb[0].mxu0
        %v906 = vadd.f32 0.0, %v905
        %v907 = vpop.f32.mrb[0].mxu0
        %v908 = vadd.f32 0.0, %v907
        %909 = vmatprep.mubr.f32.mxu0 0.0
        %910 = vmatmul.mubr.f32.gmra.mrb[0].mxu0 %v699
        %v911 = vpop.f32.mrb[0].mxu0
        %v912 = vadd.f32 0.0, %v911
        %v913 = vpop.f32.mrb[0].mxu0
        %v914 = vadd.f32 0.0, %v913
        %915 = vmatprep.mubr.f32.mxu0 0.0
        %916 = vmatmul.mubr.f32.gmra.mrb[0].mxu0 %v702
        %v917 = vpop.f32.mrb[0].mxu0
        %v918 = vadd.f32 0.0, %v917
        %v919 = vpop.f32.mrb[0].mxu0
        %v920 = vadd.f32 0.0, %v919
        %921 = vmatprep.mubr.f32.mxu0 0.0
        %922 = vmatmul.mubr.f32.gmra.mrb[0].mxu0 %v705
        %v923 = vpop.f32.mrb[0].mxu0
        %v924 = vadd.f32 0.0, %v923
        %v925 = vpop.f32.mrb[0].mxu0
        %v926 = vadd.f32 0.0, %v925
        %927 = vmatprep.mubr.f32.mxu0 0.0
        %928 = vmatmul.mubr.f32.gmra.mrb[0].mxu0 %v708
        %v929 = vpop.f32.mrb[0].mxu0
        %v930 = vadd.f32 0.0, %v929
        %v931 = vpop.f32.mrb[0].mxu0
        %v932 = vadd.f32 0.0, %v931
        %933 = vmatprep.mubr.f32.mxu0 0.0
        %934 = vmatmul.mubr.f32.gmra.mrb[0].mxu0 %v711
        %v935 = vpop.f32.mrb[0].mxu0
        %v936 = vadd.f32 0.0, %v935
        %v937 = vpop.f32.mrb[0].mxu0
        %v938 = vadd.f32 0.0, %v937
        %939 = vmatprep.mubr.f32.mxu0 0.0
        %940 = vmatmul.mubr.f32.gmra.mrb[0].mxu0 %v714
        %v941 = vpop.f32.mrb[0].mxu0
        %v942 = vadd.f32 0.0, %v941
        %v943 = vpop.f32.mrb[0].mxu0
        %v944 = vadd.f32 0.0, %v943
        %945 = vmatprep.mubr.f32.mxu0 0.0
        %946 = vmatmul.mubr.f32.gmra.mrb[0].mxu0 %v717
        %v947 = vpop.f32.mrb[0].mxu0
        %v948 = vadd.f32 0.0, %v947
        %v949 = vpop.f32.mrb[0].mxu0
        %v950 = vadd.f32 0.0, %v949
        %951 = vmatprep.mubr.f32.mxu0 0.0
        %952 = vmatmul.mubr.f32.gmra.mrb[0].mxu0 %v720
        %v953 = vpop.f32.mrb[0].mxu0
        %v954 = vadd.f32 0.0, %v953
        %v955 = vpop.f32.mrb[0].mxu0
        %v956 = vadd.f32 0.0, %v955
        %957 = vmatprep.mubr.f32.mxu0 0.0
        %958 = vmatmul.mubr.f32.gmra.mrb[0].mxu0 %v723
        %v959 = vpop.f32.mrb[0].mxu0
        %v960 = vadd.f32 0.0, %v959
        %v961 = vpop.f32.mrb[0].mxu0
        %v962 = vadd.f32 0.0, %v961
        %963 = vmatprep.mubr.f32.mxu0 0.0
        %964 = vmatmul.mubr.f32.gmra.mrb[0].mxu0 %v726
        %v965 = vpop.f32.mrb[0].mxu0
        %v966 = vadd.f32 0.0, %v965
        %v967 = vpop.f32.mrb[0].mxu0
        %v968 = vadd.f32 0.0, %v967
        %969 = vmatprep.mubr.f32.mxu0 0.0
        %970 = vmatmul.mubr.f32.gmra.mrb[0].mxu0 %v729
        %v971 = vpop.f32.mrb[0].mxu0
        %v972 = vadd.f32 0.0, %v971
        %v973 = vpop.f32.mrb[0].mxu0
        %v974 = vadd.f32 0.0, %v973
        %975 = vmatprep.mubr.f32.mxu0 0.0
        %976 = vmatmul.mubr.f32.gmra.mrb[0].mxu0 %v732
        %v977 = vpop.f32.mrb[0].mxu0
        %v978 = vadd.f32 0.0, %v977
        %v979 = vpop.f32.mrb[0].mxu0
        %v980 = vadd.f32 0.0, %v979
        %981 = vmatprep.mubr.f32.mxu0 0.0
        %982 = vmatmul.mubr.f32.gmra.mrb[0].mxu0 %v735
        %v983 = vpop.f32.mrb[0].mxu0
        %v984 = vadd.f32 0.0, %v983
        %v985 = vpop.f32.mrb[0].mxu0
        %v986 = vadd.f32 0.0, %v985
        %987 = vmatprep.mubr.f32.mxu0 0.0
        %988 = vmatmul.mubr.f32.gmra.mrb[0].mxu0 %v738
        %v989 = vpop.f32.mrb[0].mxu0
        %v990 = vadd.f32 0.0, %v989
        %v991 = vpop.f32.mrb[0].mxu0
        %v992 = vadd.f32 0.0, %v991
        %993 = vmatprep.mubr.f32.mxu0 0.0
        %994 = vmatmul.mubr.f32.gmra.mrb[0].mxu0 %v741
        %v995 = vpop.f32.mrb[0].mxu0
        %v996 = vadd.f32 0.0, %v995
        %v997 = vpop.f32.mrb[0].mxu0
        %v998 = vadd.f32 0.0, %v997
        %999 = vmatprep.mubr.f32.mxu0 0.0
        %1000 = vmatmul.mubr.f32.gmra.mrb[0].mxu0 %v744
        %v1001 = vpop.f32.mrb[0].mxu0
        %v1002 = vadd.f32 0.0, %v1001
        %v1003 = vpop.f32.mrb[0].mxu0
        %v1004 = vadd.f32 0.0, %v1003
        %1005 = vmatprep.mubr.f32.mxu0 0.0
        %1006 = vmatmul.mubr.f32.gmra.mrb[0].mxu0 %v747
        %v1007 = vpop.f32.mrb[0].mxu0
        %v1008 = vadd.f32 0.0, %v1007
        %v1009 = vpop.f32.mrb[0].mxu0
        %v1010 = vadd.f32 0.0, %v1009
        %1011 = vmatprep.mubr.f32.mxu0 0.0
        %1012 = vmatmul.mubr.f32.gmra.mrb[0].mxu0 %v750
        %v1013 = vpop.f32.mrb[0].mxu0
        %v1014 = vadd.f32 0.0, %v1013
        %v1015 = vpop.f32.mrb[0].mxu0
        %v1016 = vadd.f32 0.0, %v1015
        %1017 = vmatprep.mubr.f32.mxu0 0.0
        %1018 = vmatmul.mubr.f32.gmra.mrb[0].mxu0 %v753
        %v1019 = vpop.f32.mrb[0].mxu0
        %v1020 = vadd.f32 0.0, %v1019
        %v1021 = vpop.f32.mrb[0].mxu0
        %v1022 = vadd.f32 0.0, %v1021
        %1023 = vdwg.mxu0
        %1024 = vmatprep.subr.mxu0 %v765
        %1025 = vmatpush1.msra.mxu0 %v762
        %1026 = vmatprep.subr.mxu0 0.0
        %1027 = vmatpush1.msra.mxu0 0.0
        %1028 = vmatprep.subr.mxu0 0.0
        %1029 = vmatpush1.msra.mxu0 0.0
        %1030 = vmatprep.subr.mxu0 0.0
        %1031 = vmatpush1.msra.mxu0 0.0
        %1032 = vmatprep.subr.mxu0 0.0
        %1033 = vmatpush1.msra.mxu0 0.0
        %1034 = vmatprep.subr.mxu0 0.0
        %1035 = vmatpush1.msra.mxu0 0.0
        %1036 = vmatprep.subr.mxu0 0.0
        %1037 = vmatpush1.msra.mxu0 0.0
        %1038 = vmatprep.subr.mxu0 0.0
        %1039 = vmatpush1.msra.mxu0 0.0
        %1040 = vmatprep.subr.mxu0 0.0
        %1041 = vmatpush1.msra.mxu0 0.0
        %1042 = vmatprep.subr.mxu0 0.0
        %1043 = vmatpush1.msra.mxu0 0.0
        %1044 = vmatprep.subr.mxu0 0.0
        %1045 = vmatpush1.msra.mxu0 0.0
        %1046 = vmatprep.subr.mxu0 0.0
        %1047 = vmatpush1.msra.mxu0 0.0
        %1048 = vmatprep.subr.mxu0 0.0
        %1049 = vmatpush1.msra.mxu0 0.0
        %1050 = vmatprep.subr.mxu0 0.0
        %1051 = vmatpush1.msra.mxu0 0.0
        %1052 = vmatprep.subr.mxu0 0.0
        %1053 = vmatpush1.msra.mxu0 0.0
        %1054 = vmatprep.subr.mxu0 0.0
        %1055 = vmatpush1.msra.mxu0 0.0
        %1056 = vmatprep.subr.mxu0 0.0
        %1057 = vmatpush1.msra.mxu0 0.0
        %1058 = vmatprep.subr.mxu0 0.0
        %1059 = vmatpush1.msra.mxu0 0.0
        %1060 = vmatprep.subr.mxu0 0.0
        %1061 = vmatpush1.msra.mxu0 0.0
        %1062 = vmatprep.subr.mxu0 0.0
        %1063 = vmatpush1.msra.mxu0 0.0
        %1064 = vmatprep.subr.mxu0 0.0
        %1065 = vmatpush1.msra.mxu0 0.0
        %1066 = vmatprep.subr.mxu0 0.0
        %1067 = vmatpush1.msra.mxu0 0.0
        %1068 = vmatprep.subr.mxu0 0.0
        %1069 = vmatpush1.msra.mxu0 0.0
        %1070 = vmatprep.subr.mxu0 0.0
        %1071 = vmatpush1.msra.mxu0 0.0
        %1072 = vmatprep.subr.mxu0 0.0
        %1073 = vmatpush1.msra.mxu0 0.0
        %1074 = vmatprep.subr.mxu0 0.0
        %1075 = vmatpush1.msra.mxu0 0.0
        %1076 = vmatprep.subr.mxu0 0.0
        %1077 = vmatpush1.msra.mxu0 0.0
        %1078 = vmatprep.subr.mxu0 0.0
        %1079 = vmatpush1.msra.mxu0 0.0
        %1080 = vmatprep.subr.mxu0 0.0
        %1081 = vmatpush1.msra.mxu0 0.0
        %1082 = vmatprep.subr.mxu0 0.0
        %1083 = vmatpush1.msra.mxu0 0.0
        %1084 = vmatprep.subr.mxu0 0.0
        %1085 = vmatpush1.msra.mxu0 0.0
        %1086 = vmatprep.subr.mxu0 0.0
        %1087 = vmatpush1.msra.mxu0 0.0
        %1088 = vmatprep.mubr.f32.mxu0 0.0
        %1089 = vmatmul.mubr.f32.gmra.mrb[0].mxu0 %v660
        %v1090 = vpop.f32.mrb[0].mxu0
        %v1091 = vadd.f32 0.0, %v1090
        %v1092 = vpop.f32.mrb[0].mxu0
        %v1093 = vadd.f32 0.0, %v1092
        %1094 = vmatprep.mubr.f32.mxu0 0.0
        %1095 = vmatmul.mubr.f32.gmra.mrb[0].mxu0 %v663
        %v1096 = vpop.f32.mrb[0].mxu0
        %v1097 = vadd.f32 0.0, %v1096
        %v1098 = vpop.f32.mrb[0].mxu0
        %v1099 = vadd.f32 0.0, %v1098
        %1100 = vmatprep.mubr.f32.mxu0 0.0
        %1101 = vmatmul.mubr.f32.gmra.mrb[0].mxu0 %v666
        %v1102 = vpop.f32.mrb[0].mxu0
        %v1103 = vadd.f32 0.0, %v1102
        %v1104 = vpop.f32.mrb[0].mxu0
        %v1105 = vadd.f32 0.0, %v1104
        %1106 = vmatprep.mubr.f32.mxu0 0.0
        %1107 = vmatmul.mubr.f32.gmra.mrb[0].mxu0 %v669
        %v1108 = vpop.f32.mrb[0].mxu0
        %v1109 = vadd.f32 0.0, %v1108
        %v1110 = vpop.f32.mrb[0].mxu0
        %v1111 = vadd.f32 0.0, %v1110
        %1112 = vmatprep.mubr.f32.mxu0 0.0
        %1113 = vmatmul.mubr.f32.gmra.mrb[0].mxu0 %v672
        %v1114 = vpop.f32.mrb[0].mxu0
        %v1115 = vadd.f32 0.0, %v1114
        %v1116 = vpop.f32.mrb[0].mxu0
        %v1117 = vadd.f32 0.0, %v1116
        %1118 = vmatprep.mubr.f32.mxu0 0.0
        %1119 = vmatmul.mubr.f32.gmra.mrb[0].mxu0 %v675
        %v1120 = vpop.f32.mrb[0].mxu0
        %v1121 = vadd.f32 0.0, %v1120
        %v1122 = vpop.f32.mrb[0].mxu0
        %v1123 = vadd.f32 0.0, %v1122
        %1124 = vmatprep.mubr.f32.mxu0 0.0
        %1125 = vmatmul.mubr.f32.gmra.mrb[0].mxu0 %v678
        %v1126 = vpop.f32.mrb[0].mxu0
        %v1127 = vadd.f32 0.0, %v1126
        %v1128 = vpop.f32.mrb[0].mxu0
        %v1129 = vadd.f32 0.0, %v1128
        %1130 = vmatprep.mubr.f32.mxu0 0.0
        %1131 = vmatmul.mubr.f32.gmra.mrb[0].mxu0 %v681
        %v1132 = vpop.f32.mrb[0].mxu0
        %v1133 = vadd.f32 0.0, %v1132
        %v1134 = vpop.f32.mrb[0].mxu0
        %v1135 = vadd.f32 0.0, %v1134
        %1136 = vmatprep.mubr.f32.mxu0 0.0
        %1137 = vmatmul.mubr.f32.gmra.mrb[0].mxu0 %v684
        %v1138 = vpop.f32.mrb[0].mxu0
        %v1139 = vadd.f32 0.0, %v1138
        %v1140 = vpop.f32.mrb[0].mxu0
        %v1141 = vadd.f32 0.0, %v1140
        %1142 = vmatprep.mubr.f32.mxu0 0.0
        %1143 = vmatmul.mubr.f32.gmra.mrb[0].mxu0 %v687
        %v1144 = vpop.f32.mrb[0].mxu0
        %v1145 = vadd.f32 0.0, %v1144
        %v1146 = vpop.f32.mrb[0].mxu0
        %v1147 = vadd.f32 0.0, %v1146
        %1148 = vmatprep.mubr.f32.mxu0 0.0
        %1149 = vmatmul.mubr.f32.gmra.mrb[0].mxu0 %v690
        %v1150 = vpop.f32.mrb[0].mxu0
        %v1151 = vadd.f32 0.0, %v1150
        %v1152 = vpop.f32.mrb[0].mxu0
        %v1153 = vadd.f32 0.0, %v1152
        %1154 = vmatprep.mubr.f32.mxu0 0.0
        %1155 = vmatmul.mubr.f32.gmra.mrb[0].mxu0 %v693
        %v1156 = vpop.f32.mrb[0].mxu0
        %v1157 = vadd.f32 0.0, %v1156
        %v1158 = vpop.f32.mrb[0].mxu0
        %v1159 = vadd.f32 0.0, %v1158
        %1160 = vmatprep.mubr.f32.mxu0 0.0
        %1161 = vmatmul.mubr.f32.gmra.mrb[0].mxu0 %v696
        %v1162 = vpop.f32.mrb[0].mxu0
        %v1163 = vadd.f32 0.0, %v1162
        %v1164 = vpop.f32.mrb[0].mxu0
        %v1165 = vadd.f32 0.0, %v1164
        %1166 = vmatprep.mubr.f32.mxu0 0.0
        %1167 = vmatmul.mubr.f32.gmra.mrb[0].mxu0 %v699
        %v1168 = vpop.f32.mrb[0].mxu0
        %v1169 = vadd.f32 0.0, %v1168
        %v1170 = vpop.f32.mrb[0].mxu0
        %v1171 = vadd.f32 0.0, %v1170
        %1172 = vmatprep.mubr.f32.mxu0 0.0
        %1173 = vmatmul.mubr.f32.gmra.mrb[0].mxu0 %v702
        %v1174 = vpop.f32.mrb[0].mxu0
        %v1175 = vadd.f32 0.0, %v1174
        %v1176 = vpop.f32.mrb[0].mxu0
        %v1177 = vadd.f32 0.0, %v1176
        %1178 = vmatprep.mubr.f32.mxu0 0.0
        %1179 = vmatmul.mubr.f32.gmra.mrb[0].mxu0 %v705
        %v1180 = vpop.f32.mrb[0].mxu0
        %v1181 = vadd.f32 0.0, %v1180
        %v1182 = vpop.f32.mrb[0].mxu0
        %v1183 = vadd.f32 0.0, %v1182
        %1184 = vmatprep.mubr.f32.mxu0 0.0
        %1185 = vmatmul.mubr.f32.gmra.mrb[0].mxu0 %v708
        %v1186 = vpop.f32.mrb[0].mxu0
        %v1187 = vadd.f32 0.0, %v1186
        %v1188 = vpop.f32.mrb[0].mxu0
        %v1189 = vadd.f32 0.0, %v1188
        %1190 = vmatprep.mubr.f32.mxu0 0.0
        %1191 = vmatmul.mubr.f32.gmra.mrb[0].mxu0 %v711
        %v1192 = vpop.f32.mrb[0].mxu0
        %v1193 = vadd.f32 0.0, %v1192
        %v1194 = vpop.f32.mrb[0].mxu0
        %v1195 = vadd.f32 0.0, %v1194
        %1196 = vmatprep.mubr.f32.mxu0 0.0
        %1197 = vmatmul.mubr.f32.gmra.mrb[0].mxu0 %v714
        %v1198 = vpop.f32.mrb[0].mxu0
        %v1199 = vadd.f32 0.0, %v1198
        %v1200 = vpop.f32.mrb[0].mxu0
        %v1201 = vadd.f32 0.0, %v1200
        %1202 = vmatprep.mubr.f32.mxu0 0.0
        %1203 = vmatmul.mubr.f32.gmra.mrb[0].mxu0 %v717
        %v1204 = vpop.f32.mrb[0].mxu0
        %v1205 = vadd.f32 0.0, %v1204
        %v1206 = vpop.f32.mrb[0].mxu0
        %v1207 = vadd.f32 0.0, %v1206
        %1208 = vmatprep.mubr.f32.mxu0 0.0
        %1209 = vmatmul.mubr.f32.gmra.mrb[0].mxu0 %v720
        %v1210 = vpop.f32.mrb[0].mxu0
        %v1211 = vadd.f32 0.0, %v1210
        %v1212 = vpop.f32.mrb[0].mxu0
        %v1213 = vadd.f32 0.0, %v1212
        %1214 = vmatprep.mubr.f32.mxu0 0.0
        %1215 = vmatmul.mubr.f32.gmra.mrb[0].mxu0 %v723
        %v1216 = vpop.f32.mrb[0].mxu0
        %v1217 = vadd.f32 0.0, %v1216
        %v1218 = vpop.f32.mrb[0].mxu0
        %v1219 = vadd.f32 0.0, %v1218
        %1220 = vmatprep.mubr.f32.mxu0 0.0
        %1221 = vmatmul.mubr.f32.gmra.mrb[0].mxu0 %v726
        %v1222 = vpop.f32.mrb[0].mxu0
        %v1223 = vadd.f32 0.0, %v1222
        %v1224 = vpop.f32.mrb[0].mxu0
        %v1225 = vadd.f32 0.0, %v1224
        %1226 = vmatprep.mubr.f32.mxu0 0.0
        %1227 = vmatmul.mubr.f32.gmra.mrb[0].mxu0 %v729
        %v1228 = vpop.f32.mrb[0].mxu0
        %v1229 = vadd.f32 0.0, %v1228
        %v1230 = vpop.f32.mrb[0].mxu0
        %v1231 = vadd.f32 0.0, %v1230
        %1232 = vmatprep.mubr.f32.mxu0 0.0
        %1233 = vmatmul.mubr.f32.gmra.mrb[0].mxu0 %v732
        %v1234 = vpop.f32.mrb[0].mxu0
        %v1235 = vadd.f32 0.0, %v1234
        %v1236 = vpop.f32.mrb[0].mxu0
        %v1237 = vadd.f32 0.0, %v1236
        %1238 = vmatprep.mubr.f32.mxu0 0.0
        %1239 = vmatmul.mubr.f32.gmra.mrb[0].mxu0 %v735
        %v1240 = vpop.f32.mrb[0].mxu0
        %v1241 = vadd.f32 0.0, %v1240
        %v1242 = vpop.f32.mrb[0].mxu0
        %v1243 = vadd.f32 0.0, %v1242
        %1244 = vmatprep.mubr.f32.mxu0 0.0
        %1245 = vmatmul.mubr.f32.gmra.mrb[0].mxu0 %v738
        %v1246 = vpop.f32.mrb[0].mxu0
        %v1247 = vadd.f32 0.0, %v1246
        %v1248 = vpop.f32.mrb[0].mxu0
        %v1249 = vadd.f32 0.0, %v1248
        %1250 = vmatprep.mubr.f32.mxu0 0.0
        %1251 = vmatmul.mubr.f32.gmra.mrb[0].mxu0 %v741
        %v1252 = vpop.f32.mrb[0].mxu0
        %v1253 = vadd.f32 0.0, %v1252
        %v1254 = vpop.f32.mrb[0].mxu0
        %v1255 = vadd.f32 0.0, %v1254
        %1256 = vmatprep.mubr.f32.mxu0 0.0
        %1257 = vmatmul.mubr.f32.gmra.mrb[0].mxu0 %v744
        %v1258 = vpop.f32.mrb[0].mxu0
        %v1259 = vadd.f32 0.0, %v1258
        %v1260 = vpop.f32.mrb[0].mxu0
        %v1261 = vadd.f32 0.0, %v1260
        %1262 = vmatprep.mubr.f32.mxu0 0.0
        %1263 = vmatmul.mubr.f32.gmra.mrb[0].mxu0 %v747
        %v1264 = vpop.f32.mrb[0].mxu0
        %v1265 = vadd.f32 0.0, %v1264
        %v1266 = vpop.f32.mrb[0].mxu0
        %v1267 = vadd.f32 0.0, %v1266
        %1268 = vmatprep.mubr.f32.mxu0 0.0
        %1269 = vmatmul.mubr.f32.gmra.mrb[0].mxu0 %v750
        %v1270 = vpop.f32.mrb[0].mxu0
        %v1271 = vadd.f32 0.0, %v1270
        %v1272 = vpop.f32.mrb[0].mxu0
        %v1273 = vadd.f32 0.0, %v1272
        %1274 = vmatprep.mubr.f32.mxu0 0.0
        %1275 = vmatmul.mubr.f32.gmra.mrb[0].mxu0 %v753
        %v1276 = vpop.f32.mrb[0].mxu0
        %v1277 = vadd.f32 0.0, %v1276
        %v1278 = vpop.f32.mrb[0].mxu0
        %v1279 = vadd.f32 0.0, %v1278
        %1280 = vdwg.mxu0
        %v1281 = vmul.f32 %v834, %v654
        %v1282 = vmul.f32 %v836, %v655
        %v1283 = vmul.f32 %v1091, %v656
        %v1284 = vmul.f32 %v1093, %v657
        %v1285 = vmul.f32 %v840, %v654
        %v1286 = vmul.f32 %v842, %v655
        %v1287 = vmul.f32 %v1097, %v656
        %v1288 = vmul.f32 %v1099, %v657
        %v1289 = vmul.f32 %v846, %v654
        %v1290 = vmul.f32 %v848, %v655
        %v1291 = vmul.f32 %v1103, %v656
        %v1292 = vmul.f32 %v1105, %v657
        %v1293 = vmul.f32 %v852, %v654
        %v1294 = vmul.f32 %v854, %v655
        %v1295 = vmul.f32 %v1109, %v656
        %v1296 = vmul.f32 %v1111, %v657
        %v1297 = vmul.f32 %v858, %v654
        %v1298 = vmul.f32 %v860, %v655
        %v1299 = vmul.f32 %v1115, %v656
        %v1300 = vmul.f32 %v1117, %v657
        %v1301 = vmul.f32 %v864, %v654
        %v1302 = vmul.f32 %v866, %v655
        %v1303 = vmul.f32 %v1121, %v656
        %v1304 = vmul.f32 %v1123, %v657
        %v1305 = vmul.f32 %v870, %v654
        %v1306 = vmul.f32 %v872, %v655
        %v1307 = vmul.f32 %v1127, %v656
        %v1308 = vmul.f32 %v1129, %v657
        %v1309 = vmul.f32 %v876, %v654
        %v1310 = vmul.f32 %v878, %v655
        %v1311 = vmul.f32 %v1133, %v656
        %v1312 = vmul.f32 %v1135, %v657
        %v1313 = vmul.f32 %v882, %v654
        %v1314 = vmul.f32 %v884, %v655
        %v1315 = vmul.f32 %v1139, %v656
        %v1316 = vmul.f32 %v1141, %v657
        %v1317 = vmul.f32 %v888, %v654
        %v1318 = vmul.f32 %v890, %v655
        %v1319 = vmul.f32 %v1145, %v656
        %v1320 = vmul.f32 %v1147, %v657
        %v1321 = vmul.f32 %v894, %v654
        %v1322 = vmul.f32 %v896, %v655
        %v1323 = vmul.f32 %v1151, %v656
        %v1324 = vmul.f32 %v1153, %v657
        %v1325 = vmul.f32 %v900, %v654
        %v1326 = vmul.f32 %v902, %v655
        %v1327 = vmul.f32 %v1157, %v656
        %v1328 = vmul.f32 %v1159, %v657
        %v1329 = vmul.f32 %v906, %v654
        %v1330 = vmul.f32 %v908, %v655
        %v1331 = vmul.f32 %v1163, %v656
        %v1332 = vmul.f32 %v1165, %v657
        %v1333 = vmul.f32 %v912, %v654
        %v1334 = vmul.f32 %v914, %v655
        %v1335 = vmul.f32 %v1169, %v656
        %v1336 = vmul.f32 %v1171, %v657
        %v1337 = vmul.f32 %v918, %v654
        %v1338 = vmul.f32 %v920, %v655
        %v1339 = vmul.f32 %v1175, %v656
        %v1340 = vmul.f32 %v1177, %v657
        %v1341 = vmul.f32 %v924, %v654
        %v1342 = vmul.f32 %v926, %v655
        %v1343 = vmul.f32 %v1181, %v656
        %v1344 = vmul.f32 %v1183, %v657
        %v1345 = vmul.f32 %v930, %v654
        %v1346 = vmul.f32 %v932, %v655
        %v1347 = vmul.f32 %v1187, %v656
        %v1348 = vmul.f32 %v1189, %v657
        %v1349 = vmul.f32 %v936, %v654
        %v1350 = vmul.f32 %v938, %v655
        %v1351 = vmul.f32 %v1193, %v656
        %v1352 = vmul.f32 %v1195, %v657
        %v1353 = vmul.f32 %v942, %v654
        %v1354 = vmul.f32 %v944, %v655
        %v1355 = vmul.f32 %v1199, %v656
        %v1356 = vmul.f32 %v1201, %v657
        %v1357 = vmul.f32 %v948, %v654
        %v1358 = vmul.f32 %v950, %v655
        %v1359 = vmul.f32 %v1205, %v656
        %v1360 = vmul.f32 %v1207, %v657
        %v1361 = vmul.f32 %v954, %v654
        %v1362 = vmul.f32 %v956, %v655
        %v1363 = vmul.f32 %v1211, %v656
        %v1364 = vmul.f32 %v1213, %v657
        %v1365 = vmul.f32 %v960, %v654
        %v1366 = vmul.f32 %v962, %v655
        %v1367 = vmul.f32 %v1217, %v656
        %v1368 = vmul.f32 %v1219, %v657
        %v1369 = vmul.f32 %v966, %v654
        %v1370 = vmul.f32 %v968, %v655
        %v1371 = vmul.f32 %v1223, %v656
        %v1372 = vmul.f32 %v1225, %v657
        %v1373 = vmul.f32 %v972, %v654
        %v1374 = vmul.f32 %v974, %v655
        %v1375 = vmul.f32 %v1229, %v656
        %v1376 = vmul.f32 %v1231, %v657
        %v1377 = vmul.f32 %v978, %v654
        %v1378 = vmul.f32 %v980, %v655
        %v1379 = vmul.f32 %v1235, %v656
        %v1380 = vmul.f32 %v1237, %v657
        %v1381 = vmul.f32 %v984, %v654
        %v1382 = vmul.f32 %v986, %v655
        %v1383 = vmul.f32 %v1241, %v656
        %v1384 = vmul.f32 %v1243, %v657
        %v1385 = vmul.f32 %v990, %v654
        %v1386 = vmul.f32 %v992, %v655
        %v1387 = vmul.f32 %v1247, %v656
        %v1388 = vmul.f32 %v1249, %v657
        %v1389 = vmul.f32 %v996, %v654
        %v1390 = vmul.f32 %v998, %v655
        %v1391 = vmul.f32 %v1253, %v656
        %v1392 = vmul.f32 %v1255, %v657
        %v1393 = vmul.f32 %v1002, %v654
        %v1394 = vmul.f32 %v1004, %v655
        %v1395 = vmul.f32 %v1259, %v656
        %v1396 = vmul.f32 %v1261, %v657
        %v1397 = vmul.f32 %v1008, %v654
        %v1398 = vmul.f32 %v1010, %v655
        %v1399 = vmul.f32 %v1265, %v656
        %v1400 = vmul.f32 %v1267, %v657
        %v1401 = vmul.f32 %v1014, %v654
        %v1402 = vmul.f32 %v1016, %v655
        %v1403 = vmul.f32 %v1271, %v656
        %v1404 = vmul.f32 %v1273, %v657
        %v1405 = vmul.f32 %v1020, %v654
        %v1406 = vmul.f32 %v1022, %v655
        %v1407 = vmul.f32 %v1277, %v656
        %v1408 = vmul.f32 %v1279, %v657
        %1409 = vst [vmem:[%s266] sm:$0xff] %v1281
        %1410 = vst [vmem:[%s266 + $0x8] sm:$0xff] %v1282
        %1411 = vst [vmem:[%s266 + $0x10] sm:$0xff] %v1283
        %1412 = vst [vmem:[%s266 + $0x18] sm:$0xff] %v1284
        %1413 = vst [vmem:[%s266 + $0x20] sm:$0xff] %v1285
        %1414 = vst [vmem:[%s266 + $0x28] sm:$0xff] %v1286
        %1415 = vst [vmem:[%s266 + $0x30] sm:$0xff] %v1287
        %1416 = vst [vmem:[%s266 + $0x38] sm:$0xff] %v1288
        %1417 = vst [vmem:[%s266 + $0x40] sm:$0xff] %v1289
        %1418 = vst [vmem:[%s266 + $0x48] sm:$0xff] %v1290
        %1419 = vst [vmem:[%s266 + $0x50] sm:$0xff] %v1291
        %1420 = vst [vmem:[%s266 + $0x58] sm:$0xff] %v1292
        %1421 = vst [vmem:[%s266 + $0x60] sm:$0xff] %v1293
        %1422 = vst [vmem:[%s266 + $0x68] sm:$0xff] %v1294
        %1423 = vst [vmem:[%s266 + $0x70] sm:$0xff] %v1295
        %1424 = vst [vmem:[%s266 + $0x78] sm:$0xff] %v1296
        %1425 = vst [vmem:[%s266 + $0x80] sm:$0xff] %v1297
        %1426 = vst [vmem:[%s266 + $0x88] sm:$0xff] %v1298
        %1427 = vst [vmem:[%s266 + $0x90] sm:$0xff] %v1299
        %1428 = vst [vmem:[%s266 + $0x98] sm:$0xff] %v1300
        %1429 = vst [vmem:[%s266 + $0xa0] sm:$0xff] %v1301
        %1430 = vst [vmem:[%s266 + $0xa8] sm:$0xff] %v1302
        %1431 = vst [vmem:[%s266 + $0xb0] sm:$0xff] %v1303
        %1432 = vst [vmem:[%s266 + $0xb8] sm:$0xff] %v1304
        %1433 = vst [vmem:[%s266 + $0xc0] sm:$0xff] %v1305
        %1434 = vst [vmem:[%s266 + $0xc8] sm:$0xff] %v1306
        %1435 = vst [vmem:[%s266 + $0xd0] sm:$0xff] %v1307
        %1436 = vst [vmem:[%s266 + $0xd8] sm:$0xff] %v1308
        %1437 = vst [vmem:[%s266 + $0xe0] sm:$0xff] %v1309
        %1438 = vst [vmem:[%s266 + $0xe8] sm:$0xff] %v1310
        %1439 = vst [vmem:[%s266 + $0xf0] sm:$0xff] %v1311
        %1440 = vst [vmem:[%s266 + $0xf8] sm:$0xff] %v1312
        %1441 = vst [vmem:[%s266 + $0x100] sm:$0xff] %v1313
        %1442 = vst [vmem:[%s266 + $0x108] sm:$0xff] %v1314
        %1443 = vst [vmem:[%s266 + $0x110] sm:$0xff] %v1315
        %1444 = vst [vmem:[%s266 + $0x118] sm:$0xff] %v1316
        %1445 = vst [vmem:[%s266 + $0x120] sm:$0xff] %v1317
        %1446 = vst [vmem:[%s266 + $0x128] sm:$0xff] %v1318
        %1447 = vst [vmem:[%s266 + $0x130] sm:$0xff] %v1319
        %1448 = vst [vmem:[%s266 + $0x138] sm:$0xff] %v1320
        %1449 = vst [vmem:[%s266 + $0x140] sm:$0xff] %v1321
        %1450 = vst [vmem:[%s266 + $0x148] sm:$0xff] %v1322
        %1451 = vst [vmem:[%s266 + $0x150] sm:$0xff] %v1323
        %1452 = vst [vmem:[%s266 + $0x158] sm:$0xff] %v1324
        %1453 = vst [vmem:[%s266 + $0x160] sm:$0xff] %v1325
        %1454 = vst [vmem:[%s266 + $0x168] sm:$0xff] %v1326
        %1455 = vst [vmem:[%s266 + $0x170] sm:$0xff] %v1327
        %1456 = vst [vmem:[%s266 + $0x178] sm:$0xff] %v1328
        %1457 = vst [vmem:[%s266 + $0x180] sm:$0xff] %v1329
        %1458 = vst [vmem:[%s266 + $0x188] sm:$0xff] %v1330
        %1459 = vst [vmem:[%s266 + $0x190] sm:$0xff] %v1331
        %1460 = vst [vmem:[%s266 + $0x198] sm:$0xff] %v1332
        %1461 = vst [vmem:[%s266 + $0x1a0] sm:$0xff] %v1333
        %1462 = vst [vmem:[%s266 + $0x1a8] sm:$0xff] %v1334
        %1463 = vst [vmem:[%s266 + $0x1b0] sm:$0xff] %v1335
        %1464 = vst [vmem:[%s266 + $0x1b8] sm:$0xff] %v1336
        %1465 = vst [vmem:[%s266 + $0x1c0] sm:$0xff] %v1337
        %1466 = vst [vmem:[%s266 + $0x1c8] sm:$0xff] %v1338
        %1467 = vst [vmem:[%s266 + $0x1d0] sm:$0xff] %v1339
        %1468 = vst [vmem:[%s266 + $0x1d8] sm:$0xff] %v1340
        %1469 = vst [vmem:[%s266 + $0x1e0] sm:$0xff] %v1341
        %1470 = vst [vmem:[%s266 + $0x1e8] sm:$0xff] %v1342
        %1471 = vst [vmem:[%s266 + $0x1f0] sm:$0xff] %v1343
        %1472 = vst [vmem:[%s266 + $0x1f8] sm:$0xff] %v1344
        %1473 = vst [vmem:[%s266 + $0x200] sm:$0xff] %v1345
        %1474 = vst [vmem:[%s266 + $0x208] sm:$0xff] %v1346
        %1475 = vst [vmem:[%s266 + $0x210] sm:$0xff] %v1347
        %1476 = vst [vmem:[%s266 + $0x218] sm:$0xff] %v1348
        %1477 = vst [vmem:[%s266 + $0x220] sm:$0xff] %v1349
        %1478 = vst [vmem:[%s266 + $0x228] sm:$0xff] %v1350
        %1479 = vst [vmem:[%s266 + $0x230] sm:$0xff] %v1351
        %1480 = vst [vmem:[%s266 + $0x238] sm:$0xff] %v1352
        %1481 = vst [vmem:[%s266 + $0x240] sm:$0xff] %v1353
        %1482 = vst [vmem:[%s266 + $0x248] sm:$0xff] %v1354
        %1483 = vst [vmem:[%s266 + $0x250] sm:$0xff] %v1355
        %1484 = vst [vmem:[%s266 + $0x258] sm:$0xff] %v1356
        %1485 = vst [vmem:[%s266 + $0x260] sm:$0xff] %v1357
        %1486 = vst [vmem:[%s266 + $0x268] sm:$0xff] %v1358
        %1487 = vst [vmem:[%s266 + $0x270] sm:$0xff] %v1359
        %1488 = vst [vmem:[%s266 + $0x278] sm:$0xff] %v1360
        %1489 = vst [vmem:[%s266 + $0x280] sm:$0xff] %v1361
        %1490 = vst [vmem:[%s266 + $0x288] sm:$0xff] %v1362
        %1491 = vst [vmem:[%s266 + $0x290] sm:$0xff] %v1363
        %1492 = vst [vmem:[%s266 + $0x298] sm:$0xff] %v1364
        %1493 = vst [vmem:[%s266 + $0x2a0] sm:$0xff] %v1365
        %1494 = vst [vmem:[%s266 + $0x2a8] sm:$0xff] %v1366
        %1495 = vst [vmem:[%s266 + $0x2b0] sm:$0xff] %v1367
        %1496 = vst [vmem:[%s266 + $0x2b8] sm:$0xff] %v1368
        %1497 = vst [vmem:[%s266 + $0x2c0] sm:$0xff] %v1369
        %1498 = vst [vmem:[%s266 + $0x2c8] sm:$0xff] %v1370
        %1499 = vst [vmem:[%s266 + $0x2d0] sm:$0xff] %v1371
        %1500 = vst [vmem:[%s266 + $0x2d8] sm:$0xff] %v1372
        %1501 = vst [vmem:[%s266 + $0x2e0] sm:$0xff] %v1373
        %1502 = vst [vmem:[%s266 + $0x2e8] sm:$0xff] %v1374
        %1503 = vst [vmem:[%s266 + $0x2f0] sm:$0xff] %v1375
        %1504 = vst [vmem:[%s266 + $0x2f8] sm:$0xff] %v1376
        %1505 = vst [vmem:[%s266 + $0x300] sm:$0xff] %v1377
        %1506 = vst [vmem:[%s266 + $0x308] sm:$0xff] %v1378
        %1507 = vst [vmem:[%s266 + $0x310] sm:$0xff] %v1379
        %1508 = vst [vmem:[%s266 + $0x318] sm:$0xff] %v1380
        %1509 = vst [vmem:[%s266 + $0x320] sm:$0xff] %v1381
        %1510 = vst [vmem:[%s266 + $0x328] sm:$0xff] %v1382
        %1511 = vst [vmem:[%s266 + $0x330] sm:$0xff] %v1383
        %1512 = vst [vmem:[%s266 + $0x338] sm:$0xff] %v1384
        %1513 = vst [vmem:[%s266 + $0x340] sm:$0xff] %v1385
        %1514 = vst [vmem:[%s266 + $0x348] sm:$0xff] %v1386
        %1515 = vst [vmem:[%s266 + $0x350] sm:$0xff] %v1387
        %1516 = vst [vmem:[%s266 + $0x358] sm:$0xff] %v1388
        %1517 = vst [vmem:[%s266 + $0x360] sm:$0xff] %v1389
        %1518 = vst [vmem:[%s266 + $0x368] sm:$0xff] %v1390
        %1519 = vst [vmem:[%s266 + $0x370] sm:$0xff] %v1391
        %1520 = vst [vmem:[%s266 + $0x378] sm:$0xff] %v1392
        %1521 = vst [vmem:[%s266 + $0x380] sm:$0xff] %v1393
        %1522 = vst [vmem:[%s266 + $0x388] sm:$0xff] %v1394
        %1523 = vst [vmem:[%s266 + $0x390] sm:$0xff] %v1395
        %1524 = vst [vmem:[%s266 + $0x398] sm:$0xff] %v1396
        %1525 = vst [vmem:[%s266 + $0x3a0] sm:$0xff] %v1397
        %1526 = vst [vmem:[%s266 + $0x3a8] sm:$0xff] %v1398
        %1527 = vst [vmem:[%s266 + $0x3b0] sm:$0xff] %v1399
        %1528 = vst [vmem:[%s266 + $0x3b8] sm:$0xff] %v1400
        %1529 = vst [vmem:[%s266 + $0x3c0] sm:$0xff] %v1401
        %1530 = vst [vmem:[%s266 + $0x3c8] sm:$0xff] %v1402
        %1531 = vst [vmem:[%s266 + $0x3d0] sm:$0xff] %v1403
        %1532 = vst [vmem:[%s266 + $0x3d8] sm:$0xff] %v1404
        %1533 = vst [vmem:[%s266 + $0x3e0] sm:$0xff] %v1405
        %1534 = vst [vmem:[%s266 + $0x3e8] sm:$0xff] %v1406
        %1535 = vst [vmem:[%s266 + $0x3f0] sm:$0xff] %v1407
        %1536 = vst [vmem:[%s266 + $0x3f8] sm:$0xff] %v1408
        %v1537 = vmul.f32 %v1281, 100.0
        %v1538 = vmul.f32 %v1282, 100.0
        %v1539 = vmul.f32 %v1283, 100.0
        %v1540 = vmul.f32 %v1284, 100.0
        %v1541 = vmul.f32 %v1285, 100.0
        %v1542 = vmul.f32 %v1286, 100.0
        %v1543 = vmul.f32 %v1287, 100.0
        %v1544 = vmul.f32 %v1288, 100.0
        %v1545 = vmul.f32 %v1289, 100.0
        %v1546 = vmul.f32 %v1290, 100.0
        %v1547 = vmul.f32 %v1291, 100.0
        %v1548 = vmul.f32 %v1292, 100.0
        %v1549 = vmul.f32 %v1293, 100.0
        %v1550 = vmul.f32 %v1294, 100.0
        %v1551 = vmul.f32 %v1295, 100.0
        %v1552 = vmul.f32 %v1296, 100.0
        %v1553 = vmul.f32 %v1297, 100.0
        %v1554 = vmul.f32 %v1298, 100.0
        %v1555 = vmul.f32 %v1299, 100.0
        %v1556 = vmul.f32 %v1300, 100.0
        %v1557 = vmul.f32 %v1301, 100.0
        %v1558 = vmul.f32 %v1302, 100.0
        %v1559 = vmul.f32 %v1303, 100.0
        %v1560 = vmul.f32 %v1304, 100.0
        %v1561 = vmul.f32 %v1305, 100.0
        %v1562 = vmul.f32 %v1306, 100.0
        %v1563 = vmul.f32 %v1307, 100.0
        %v1564 = vmul.f32 %v1308, 100.0
        %v1565 = vmul.f32 %v1309, 100.0
        %v1566 = vmul.f32 %v1310, 100.0
        %v1567 = vmul.f32 %v1311, 100.0
        %v1568 = vmul.f32 %v1312, 100.0
        %v1569 = vmul.f32 %v1313, 100.0
        %v1570 = vmul.f32 %v1314, 100.0
        %v1571 = vmul.f32 %v1315, 100.0
        %v1572 = vmul.f32 %v1316, 100.0
        %v1573 = vmul.f32 %v1317, 100.0
        %v1574 = vmul.f32 %v1318, 100.0
        %v1575 = vmul.f32 %v1319, 100.0
        %v1576 = vmul.f32 %v1320, 100.0
        %v1577 = vmul.f32 %v1321, 100.0
        %v1578 = vmul.f32 %v1322, 100.0
        %v1579 = vmul.f32 %v1323, 100.0
        %v1580 = vmul.f32 %v1324, 100.0
        %v1581 = vmul.f32 %v1325, 100.0
        %v1582 = vmul.f32 %v1326, 100.0
        %v1583 = vmul.f32 %v1327, 100.0
        %v1584 = vmul.f32 %v1328, 100.0
        %v1585 = vmul.f32 %v1329, 100.0
        %v1586 = vmul.f32 %v1330, 100.0
        %v1587 = vmul.f32 %v1331, 100.0
        %v1588 = vmul.f32 %v1332, 100.0
        %v1589 = vmul.f32 %v1333, 100.0
        %v1590 = vmul.f32 %v1334, 100.0
        %v1591 = vmul.f32 %v1335, 100.0
        %v1592 = vmul.f32 %v1336, 100.0
        %v1593 = vmul.f32 %v1337, 100.0
        %v1594 = vmul.f32 %v1338, 100.0
        %v1595 = vmul.f32 %v1339, 100.0
        %v1596 = vmul.f32 %v1340, 100.0
        %v1597 = vmul.f32 %v1341, 100.0
        %v1598 = vmul.f32 %v1342, 100.0
        %v1599 = vmul.f32 %v1343, 100.0
        %v1600 = vmul.f32 %v1344, 100.0
        %v1601 = vmul.f32 %v1345, 100.0
        %v1602 = vmul.f32 %v1346, 100.0
        %v1603 = vmul.f32 %v1347, 100.0
        %v1604 = vmul.f32 %v1348, 100.0
        %v1605 = vmul.f32 %v1349, 100.0
        %v1606 = vmul.f32 %v1350, 100.0
        %v1607 = vmul.f32 %v1351, 100.0
        %v1608 = vmul.f32 %v1352, 100.0
        %v1609 = vmul.f32 %v1353, 100.0
        %v1610 = vmul.f32 %v1354, 100.0
        %v1611 = vmul.f32 %v1355, 100.0
        %v1612 = vmul.f32 %v1356, 100.0
        %v1613 = vmul.f32 %v1357, 100.0
        %v1614 = vmul.f32 %v1358, 100.0
        %v1615 = vmul.f32 %v1359, 100.0
        %v1616 = vmul.f32 %v1360, 100.0
        %v1617 = vmul.f32 %v1361, 100.0
        %v1618 = vmul.f32 %v1362, 100.0
        %v1619 = vmul.f32 %v1363, 100.0
        %v1620 = vmul.f32 %v1364, 100.0
        %v1621 = vmul.f32 %v1365, 100.0
        %v1622 = vmul.f32 %v1366, 100.0
        %v1623 = vmul.f32 %v1367, 100.0
        %v1624 = vmul.f32 %v1368, 100.0
        %v1625 = vmul.f32 %v1369, 100.0
        %v1626 = vmul.f32 %v1370, 100.0
        %v1627 = vmul.f32 %v1371, 100.0
        %v1628 = vmul.f32 %v1372, 100.0
        %v1629 = vmul.f32 %v1373, 100.0
        %v1630 = vmul.f32 %v1374, 100.0
        %v1631 = vmul.f32 %v1375, 100.0
        %v1632 = vmul.f32 %v1376, 100.0
        %v1633 = vmul.f32 %v1377, 100.0
        %v1634 = vmul.f32 %v1378, 100.0
        %v1635 = vmul.f32 %v1379, 100.0
        %v1636 = vmul.f32 %v1380, 100.0
        %v1637 = vmul.f32 %v1381, 100.0
        %v1638 = vmul.f32 %v1382, 100.0
        %v1639 = vmul.f32 %v1383, 100.0
        %v1640 = vmul.f32 %v1384, 100.0
        %v1641 = vmul.f32 %v1385, 100.0
        %v1642 = vmul.f32 %v1386, 100.0
        %v1643 = vmul.f32 %v1387, 100.0
        %v1644 = vmul.f32 %v1388, 100.0
        %v1645 = vmul.f32 %v1389, 100.0
        %v1646 = vmul.f32 %v1390, 100.0
        %v1647 = vmul.f32 %v1391, 100.0
        %v1648 = vmul.f32 %v1392, 100.0
        %v1649 = vmul.f32 %v1393, 100.0
        %v1650 = vmul.f32 %v1394, 100.0
        %v1651 = vmul.f32 %v1395, 100.0
        %v1652 = vmul.f32 %v1396, 100.0
        %v1653 = vmul.f32 %v1397, 100.0
        %v1654 = vmul.f32 %v1398, 100.0
        %v1655 = vmul.f32 %v1399, 100.0
        %v1656 = vmul.f32 %v1400, 100.0
        %v1657 = vmul.f32 %v1401, 100.0
        %v1658 = vmul.f32 %v1402, 100.0
        %v1659 = vmul.f32 %v1403, 100.0
        %v1660 = vmul.f32 %v1404, 100.0
        %v1661 = vmul.f32 %v1405, 100.0
        %v1662 = vmul.f32 %v1406, 100.0
        %v1663 = vmul.f32 %v1407, 100.0
        %v1664 = vmul.f32 %v1408, 100.0
        %v1665 = vsub.f32 %v1537, 100.0
        %v1666 = vsub.f32 %v1538, 100.0
        %v1667 = vsub.f32 %v1539, 100.0
        %v1668 = vsub.f32 %v1540, 100.0
        %v1669 = vsub.f32 %v1541, 100.0
        %v1670 = vsub.f32 %v1542, 100.0
        %v1671 = vsub.f32 %v1543, 100.0
        %v1672 = vsub.f32 %v1544, 100.0
        %v1673 = vsub.f32 %v1545, 100.0
        %v1674 = vsub.f32 %v1546, 100.0
        %v1675 = vsub.f32 %v1547, 100.0
        %v1676 = vsub.f32 %v1548, 100.0
        %v1677 = vsub.f32 %v1549, 100.0
        %v1678 = vsub.f32 %v1550, 100.0
        %v1679 = vsub.f32 %v1551, 100.0
        %v1680 = vsub.f32 %v1552, 100.0
        %v1681 = vsub.f32 %v1553, 100.0
        %v1682 = vsub.f32 %v1554, 100.0
        %v1683 = vsub.f32 %v1555, 100.0
        %v1684 = vsub.f32 %v1556, 100.0
        %v1685 = vsub.f32 %v1557, 100.0
        %v1686 = vsub.f32 %v1558, 100.0
        %v1687 = vsub.f32 %v1559, 100.0
        %v1688 = vsub.f32 %v1560, 100.0
        %v1689 = vsub.f32 %v1561, 100.0
        %v1690 = vsub.f32 %v1562, 100.0
        %v1691 = vsub.f32 %v1563, 100.0
        %v1692 = vsub.f32 %v1564, 100.0
        %v1693 = vsub.f32 %v1565, 100.0
        %v1694 = vsub.f32 %v1566, 100.0
        %v1695 = vsub.f32 %v1567, 100.0
        %v1696 = vsub.f32 %v1568, 100.0
        %v1697 = vsub.f32 %v1569, 100.0
        %v1698 = vsub.f32 %v1570, 100.0
        %v1699 = vsub.f32 %v1571, 100.0
        %v1700 = vsub.f32 %v1572, 100.0
        %v1701 = vsub.f32 %v1573, 100.0
        %v1702 = vsub.f32 %v1574, 100.0
        %v1703 = vsub.f32 %v1575, 100.0
        %v1704 = vsub.f32 %v1576, 100.0
        %v1705 = vsub.f32 %v1577, 100.0
        %v1706 = vsub.f32 %v1578, 100.0
        %v1707 = vsub.f32 %v1579, 100.0
        %v1708 = vsub.f32 %v1580, 100.0
        %v1709 = vsub.f32 %v1581, 100.0
        %v1710 = vsub.f32 %v1582, 100.0
        %v1711 = vsub.f32 %v1583, 100.0
        %v1712 = vsub.f32 %v1584, 100.0
        %v1713 = vsub.f32 %v1585, 100.0
        %v1714 = vsub.f32 %v1586, 100.0
        %v1715 = vsub.f32 %v1587, 100.0
        %v1716 = vsub.f32 %v1588, 100.0
        %v1717 = vsub.f32 %v1589, 100.0
        %v1718 = vsub.f32 %v1590, 100.0
        %v1719 = vsub.f32 %v1591, 100.0
        %v1720 = vsub.f32 %v1592, 100.0
        %v1721 = vsub.f32 %v1593, 100.0
        %v1722 = vsub.f32 %v1594, 100.0
        %v1723 = vsub.f32 %v1595, 100.0
        %v1724 = vsub.f32 %v1596, 100.0
        %v1725 = vsub.f32 %v1597, 100.0
        %v1726 = vsub.f32 %v1598, 100.0
        %v1727 = vsub.f32 %v1599, 100.0
        %v1728 = vsub.f32 %v1600, 100.0
        %v1729 = vsub.f32 %v1601, 100.0
        %v1730 = vsub.f32 %v1602, 100.0
        %v1731 = vsub.f32 %v1603, 100.0
        %v1732 = vsub.f32 %v1604, 100.0
        %v1733 = vsub.f32 %v1605, 100.0
        %v1734 = vsub.f32 %v1606, 100.0
        %v1735 = vsub.f32 %v1607, 100.0
        %v1736 = vsub.f32 %v1608, 100.0
        %v1737 = vsub.f32 %v1609, 100.0
        %v1738 = vsub.f32 %v1610, 100.0
        %v1739 = vsub.f32 %v1611, 100.0
        %v1740 = vsub.f32 %v1612, 100.0
        %v1741 = vsub.f32 %v1613, 100.0
        %v1742 = vsub.f32 %v1614, 100.0
        %v1743 = vsub.f32 %v1615, 100.0
        %v1744 = vsub.f32 %v1616, 100.0
        %v1745 = vsub.f32 %v1617, 100.0
        %v1746 = vsub.f32 %v1618, 100.0
        %v1747 = vsub.f32 %v1619, 100.0
        %v1748 = vsub.f32 %v1620, 100.0
        %v1749 = vsub.f32 %v1621, 100.0
        %v1750 = vsub.f32 %v1622, 100.0
        %v1751 = vsub.f32 %v1623, 100.0
        %v1752 = vsub.f32 %v1624, 100.0
        %v1753 = vsub.f32 %v1625, 100.0
        %v1754 = vsub.f32 %v1626, 100.0
        %v1755 = vsub.f32 %v1627, 100.0
        %v1756 = vsub.f32 %v1628, 100.0
        %v1757 = vsub.f32 %v1629, 100.0
        %v1758 = vsub.f32 %v1630, 100.0
        %v1759 = vsub.f32 %v1631, 100.0
        %v1760 = vsub.f32 %v1632, 100.0
        %v1761 = vsub.f32 %v1633, 100.0
        %v1762 = vsub.f32 %v1634, 100.0
        %v1763 = vsub.f32 %v1635, 100.0
        %v1764 = vsub.f32 %v1636, 100.0
        %v1765 = vsub.f32 %v1637, 100.0
        %v1766 = vsub.f32 %v1638, 100.0
        %v1767 = vsub.f32 %v1639, 100.0
        %v1768 = vsub.f32 %v1640, 100.0
        %v1769 = vsub.f32 %v1641, 100.0
        %v1770 = vsub.f32 %v1642, 100.0
        %v1771 = vsub.f32 %v1643, 100.0
        %v1772 = vsub.f32 %v1644, 100.0
        %v1773 = vsub.f32 %v1645, 100.0
        %v1774 = vsub.f32 %v1646, 100.0
        %v1775 = vsub.f32 %v1647, 100.0
        %v1776 = vsub.f32 %v1648, 100.0
        %v1777 = vsub.f32 %v1649, 100.0
        %v1778 = vsub.f32 %v1650, 100.0
        %v1779 = vsub.f32 %v1651, 100.0
        %v1780 = vsub.f32 %v1652, 100.0
        %v1781 = vsub.f32 %v1653, 100.0
        %v1782 = vsub.f32 %v1654, 100.0
        %v1783 = vsub.f32 %v1655, 100.0
        %v1784 = vsub.f32 %v1656, 100.0
        %v1785 = vsub.f32 %v1657, 100.0
        %v1786 = vsub.f32 %v1658, 100.0
        %v1787 = vsub.f32 %v1659, 100.0
        %v1788 = vsub.f32 %v1660, 100.0
        %v1789 = vsub.f32 %v1661, 100.0
        %v1790 = vsub.f32 %v1662, 100.0
        %v1791 = vsub.f32 %v1663, 100.0
        %v1792 = vsub.f32 %v1664, 100.0
        %v1793 = vmul.f32 %v1665, 1.442695
        %v1794 = vpow.pop %v1793
        %v1795 = vmul.f32 %v1666, 1.442695
        %v1796 = vpow.pop %v1795
        %v1797 = vmul.f32 %v1667, 1.442695
        %v1798 = vpow.pop %v1797
        %v1799 = vmul.f32 %v1668, 1.442695
        %v1800 = vpow.pop %v1799
        %v1801 = vmul.f32 %v1669, 1.442695
        %v1802 = vpow.pop %v1801
        %v1803 = vmul.f32 %v1670, 1.442695
        %v1804 = vpow.pop %v1803
        %v1805 = vmul.f32 %v1671, 1.442695
        %v1806 = vpow.pop %v1805
        %v1807 = vmul.f32 %v1672, 1.442695
        %v1808 = vpow.pop %v1807
        %v1809 = vmul.f32 %v1673, 1.442695
        %v1810 = vpow.pop %v1809
        %v1811 = vmul.f32 %v1674, 1.442695
        %v1812 = vpow.pop %v1811
        %v1813 = vmul.f32 %v1675, 1.442695
        %v1814 = vpow.pop %v1813
        %v1815 = vmul.f32 %v1676, 1.442695
        %v1816 = vpow.pop %v1815
        %v1817 = vmul.f32 %v1677, 1.442695
        %v1818 = vpow.pop %v1817
        %v1819 = vmul.f32 %v1678, 1.442695
        %v1820 = vpow.pop %v1819
        %v1821 = vmul.f32 %v1679, 1.442695
        %v1822 = vpow.pop %v1821
        %v1823 = vmul.f32 %v1680, 1.442695
        %v1824 = vpow.pop %v1823
        %v1825 = vmul.f32 %v1681, 1.442695
        %v1826 = vpow.pop %v1825
        %v1827 = vmul.f32 %v1682, 1.442695
        %v1828 = vpow.pop %v1827
        %v1829 = vmul.f32 %v1683, 1.442695
        %v1830 = vpow.pop %v1829
        %v1831 = vmul.f32 %v1684, 1.442695
        %v1832 = vpow.pop %v1831
        %v1833 = vmul.f32 %v1685, 1.442695
        %v1834 = vpow.pop %v1833
        %v1835 = vmul.f32 %v1686, 1.442695
        %v1836 = vpow.pop %v1835
        %v1837 = vmul.f32 %v1687, 1.442695
        %v1838 = vpow.pop %v1837
        %v1839 = vmul.f32 %v1688, 1.442695
        %v1840 = vpow.pop %v1839
        %v1841 = vmul.f32 %v1689, 1.442695
        %v1842 = vpow.pop %v1841
        %v1843 = vmul.f32 %v1690, 1.442695
        %v1844 = vpow.pop %v1843
        %v1845 = vmul.f32 %v1691, 1.442695
        %v1846 = vpow.pop %v1845
        %v1847 = vmul.f32 %v1692, 1.442695
        %v1848 = vpow.pop %v1847
        %v1849 = vmul.f32 %v1693, 1.442695
        %v1850 = vpow.pop %v1849
        %v1851 = vmul.f32 %v1694, 1.442695
        %v1852 = vpow.pop %v1851
        %v1853 = vmul.f32 %v1695, 1.442695
        %v1854 = vpow.pop %v1853
        %v1855 = vmul.f32 %v1696, 1.442695
        %v1856 = vpow.pop %v1855
        %v1857 = vmul.f32 %v1697, 1.442695
        %v1858 = vpow.pop %v1857
        %v1859 = vmul.f32 %v1698, 1.442695
        %v1860 = vpow.pop %v1859
        %v1861 = vmul.f32 %v1699, 1.442695
        %v1862 = vpow.pop %v1861
        %v1863 = vmul.f32 %v1700, 1.442695
        %v1864 = vpow.pop %v1863
        %v1865 = vmul.f32 %v1701, 1.442695
        %v1866 = vpow.pop %v1865
        %v1867 = vmul.f32 %v1702, 1.442695
        %v1868 = vpow.pop %v1867
        %v1869 = vmul.f32 %v1703, 1.442695
        %v1870 = vpow.pop %v1869
        %v1871 = vmul.f32 %v1704, 1.442695
        %v1872 = vpow.pop %v1871
        %v1873 = vmul.f32 %v1705, 1.442695
        %v1874 = vpow.pop %v1873
        %v1875 = vmul.f32 %v1706, 1.442695
        %v1876 = vpow.pop %v1875
        %v1877 = vmul.f32 %v1707, 1.442695
        %v1878 = vpow.pop %v1877
        %v1879 = vmul.f32 %v1708, 1.442695
        %v1880 = vpow.pop %v1879
        %v1881 = vmul.f32 %v1709, 1.442695
        %v1882 = vpow.pop %v1881
        %v1883 = vmul.f32 %v1710, 1.442695
        %v1884 = vpow.pop %v1883
        %v1885 = vmul.f32 %v1711, 1.442695
        %v1886 = vpow.pop %v1885
        %v1887 = vmul.f32 %v1712, 1.442695
        %v1888 = vpow.pop %v1887
        %v1889 = vmul.f32 %v1713, 1.442695
        %v1890 = vpow.pop %v1889
        %v1891 = vmul.f32 %v1714, 1.442695
        %v1892 = vpow.pop %v1891
        %v1893 = vmul.f32 %v1715, 1.442695
        %v1894 = vpow.pop %v1893
        %v1895 = vmul.f32 %v1716, 1.442695
        %v1896 = vpow.pop %v1895
        %v1897 = vmul.f32 %v1717, 1.442695
        %v1898 = vpow.pop %v1897
        %v1899 = vmul.f32 %v1718, 1.442695
        %v1900 = vpow.pop %v1899
        %v1901 = vmul.f32 %v1719, 1.442695
        %v1902 = vpow.pop %v1901
        %v1903 = vmul.f32 %v1720, 1.442695
        %v1904 = vpow.pop %v1903
        %v1905 = vmul.f32 %v1721, 1.442695
        %v1906 = vpow.pop %v1905
        %v1907 = vmul.f32 %v1722, 1.442695
        %v1908 = vpow.pop %v1907
        %v1909 = vmul.f32 %v1723, 1.442695
        %v1910 = vpow.pop %v1909
        %v1911 = vmul.f32 %v1724, 1.442695
        %v1912 = vpow.pop %v1911
        %v1913 = vmul.f32 %v1725, 1.442695
        %v1914 = vpow.pop %v1913
        %v1915 = vmul.f32 %v1726, 1.442695
        %v1916 = vpow.pop %v1915
        %v1917 = vmul.f32 %v1727, 1.442695
        %v1918 = vpow.pop %v1917
        %v1919 = vmul.f32 %v1728, 1.442695
        %v1920 = vpow.pop %v1919
        %v1921 = vmul.f32 %v1729, 1.442695
        %v1922 = vpow.pop %v1921
        %v1923 = vmul.f32 %v1730, 1.442695
        %v1924 = vpow.pop %v1923
        %v1925 = vmul.f32 %v1731, 1.442695
        %v1926 = vpow.pop %v1925
        %v1927 = vmul.f32 %v1732, 1.442695
        %v1928 = vpow.pop %v1927
        %v1929 = vmul.f32 %v1733, 1.442695
        %v1930 = vpow.pop %v1929
        %v1931 = vmul.f32 %v1734, 1.442695
        %v1932 = vpow.pop %v1931
        %v1933 = vmul.f32 %v1735, 1.442695
        %v1934 = vpow.pop %v1933
        %v1935 = vmul.f32 %v1736, 1.442695
        %v1936 = vpow.pop %v1935
        %v1937 = vmul.f32 %v1737, 1.442695
        %v1938 = vpow.pop %v1937
        %v1939 = vmul.f32 %v1738, 1.442695
        %v1940 = vpow.pop %v1939
        %v1941 = vmul.f32 %v1739, 1.442695
        %v1942 = vpow.pop %v1941
        %v1943 = vmul.f32 %v1740, 1.442695
        %v1944 = vpow.pop %v1943
        %v1945 = vmul.f32 %v1741, 1.442695
        %v1946 = vpow.pop %v1945
        %v1947 = vmul.f32 %v1742, 1.442695
        %v1948 = vpow.pop %v1947
        %v1949 = vmul.f32 %v1743, 1.442695
        %v1950 = vpow.pop %v1949
        %v1951 = vmul.f32 %v1744, 1.442695
        %v1952 = vpow.pop %v1951
        %v1953 = vmul.f32 %v1745, 1.442695
        %v1954 = vpow.pop %v1953
        %v1955 = vmul.f32 %v1746, 1.442695
        %v1956 = vpow.pop %v1955
        %v1957 = vmul.f32 %v1747, 1.442695
        %v1958 = vpow.pop %v1957
        %v1959 = vmul.f32 %v1748, 1.442695
        %v1960 = vpow.pop %v1959
        %v1961 = vmul.f32 %v1749, 1.442695
        %v1962 = vpow.pop %v1961
        %v1963 = vmul.f32 %v1750, 1.442695
        %v1964 = vpow.pop %v1963
        %v1965 = vmul.f32 %v1751, 1.442695
        %v1966 = vpow.pop %v1965
        %v1967 = vmul.f32 %v1752, 1.442695
        %v1968 = vpow.pop %v1967
        %v1969 = vmul.f32 %v1753, 1.442695
        %v1970 = vpow.pop %v1969
        %v1971 = vmul.f32 %v1754, 1.442695
        %v1972 = vpow.pop %v1971
        %v1973 = vmul.f32 %v1755, 1.442695
        %v1974 = vpow.pop %v1973
        %v1975 = vmul.f32 %v1756, 1.442695
        %v1976 = vpow.pop %v1975
        %v1977 = vmul.f32 %v1757, 1.442695
        %v1978 = vpow.pop %v1977
        %v1979 = vmul.f32 %v1758, 1.442695
        %v1980 = vpow.pop %v1979
        %v1981 = vmul.f32 %v1759, 1.442695
        %v1982 = vpow.pop %v1981
        %v1983 = vmul.f32 %v1760, 1.442695
        %v1984 = vpow.pop %v1983
        %v1985 = vmul.f32 %v1761, 1.442695
        %v1986 = vpow.pop %v1985
        %v1987 = vmul.f32 %v1762, 1.442695
        %v1988 = vpow.pop %v1987
        %v1989 = vmul.f32 %v1763, 1.442695
        %v1990 = vpow.pop %v1989
        %v1991 = vmul.f32 %v1764, 1.442695
        %v1992 = vpow.pop %v1991
        %v1993 = vmul.f32 %v1765, 1.442695
        %v1994 = vpow.pop %v1993
        %v1995 = vmul.f32 %v1766, 1.442695
        %v1996 = vpow.pop %v1995
        %v1997 = vmul.f32 %v1767, 1.442695
        %v1998 = vpow.pop %v1997
        %v1999 = vmul.f32 %v1768, 1.442695
        %v2000 = vpow.pop %v1999
        %v2001 = vmul.f32 %v1769, 1.442695
        %v2002 = vpow.pop %v2001
        %v2003 = vmul.f32 %v1770, 1.442695
        %v2004 = vpow.pop %v2003
        %v2005 = vmul.f32 %v1771, 1.442695
        %v2006 = vpow.pop %v2005
        %v2007 = vmul.f32 %v1772, 1.442695
        %v2008 = vpow.pop %v2007
        %v2009 = vmul.f32 %v1773, 1.442695
        %v2010 = vpow.pop %v2009
        %v2011 = vmul.f32 %v1774, 1.442695
        %v2012 = vpow.pop %v2011
        %v2013 = vmul.f32 %v1775, 1.442695
        %v2014 = vpow.pop %v2013
        %v2015 = vmul.f32 %v1776, 1.442695
        %v2016 = vpow.pop %v2015
        %v2017 = vmul.f32 %v1777, 1.442695
        %v2018 = vpow.pop %v2017
        %v2019 = vmul.f32 %v1778, 1.442695
        %v2020 = vpow.pop %v2019
        %v2021 = vmul.f32 %v1779, 1.442695
        %v2022 = vpow.pop %v2021
        %v2023 = vmul.f32 %v1780, 1.442695
        %v2024 = vpow.pop %v2023
        %v2025 = vmul.f32 %v1781, 1.442695
        %v2026 = vpow.pop %v2025
        %v2027 = vmul.f32 %v1782, 1.442695
        %v2028 = vpow.pop %v2027
        %v2029 = vmul.f32 %v1783, 1.442695
        %v2030 = vpow.pop %v2029
        %v2031 = vmul.f32 %v1784, 1.442695
        %v2032 = vpow.pop %v2031
        %v2033 = vmul.f32 %v1785, 1.442695
        %v2034 = vpow.pop %v2033
        %v2035 = vmul.f32 %v1786, 1.442695
        %v2036 = vpow.pop %v2035
        %v2037 = vmul.f32 %v1787, 1.442695
        %v2038 = vpow.pop %v2037
        %v2039 = vmul.f32 %v1788, 1.442695
        %v2040 = vpow.pop %v2039
        %v2041 = vmul.f32 %v1789, 1.442695
        %v2042 = vpow.pop %v2041
        %v2043 = vmul.f32 %v1790, 1.442695
        %v2044 = vpow.pop %v2043
        %v2045 = vmul.f32 %v1791, 1.442695
        %v2046 = vpow.pop %v2045
        %v2047 = vmul.f32 %v1792, 1.442695
        %v2048 = vpow.pop %v2047
        %v2051 = vunpack.c.l.s4 1983009808
        %v2052 = vunpack.c.0.s8 %v2051
        %v2053 = vlaneseq
        %v2054 = vshrl.u32 %v2053, 7
        %v2055 = vsub.s32 %v2052, %v2054
        %v2056 = vrot.slane %v438, %v2055
        %v2057 = vcombine.high %v2056, %v2056
        %2060 = vmatprep.subr.mxu0 %v1796
        %2061 = vmatpush1.msra.mxu0 %v1794
        %2062 = vmatprep.subr.mxu0 %v1804
        %2063 = vmatpush1.msra.mxu0 %v1802
        %2064 = vmatprep.subr.mxu0 %v1812
        %2065 = vmatpush1.msra.mxu0 %v1810
        %2066 = vmatprep.subr.mxu0 %v1820
        %2067 = vmatpush1.msra.mxu0 %v1818
        %2068 = vmatprep.subr.mxu0 %v1828
        %2069 = vmatpush1.msra.mxu0 %v1826
        %2070 = vmatprep.subr.mxu0 %v1836
        %2071 = vmatpush1.msra.mxu0 %v1834
        %2072 = vmatprep.subr.mxu0 %v1844
        %2073 = vmatpush1.msra.mxu0 %v1842
        %2074 = vmatprep.subr.mxu0 %v1852
        %2075 = vmatpush1.msra.mxu0 %v1850
        %2076 = vmatprep.subr.mxu0 %v1860
        %2077 = vmatpush1.msra.mxu0 %v1858
        %2078 = vmatprep.subr.mxu0 %v1868
        %2079 = vmatpush1.msra.mxu0 %v1866
        %2080 = vmatprep.subr.mxu0 %v1876
        %2081 = vmatpush1.msra.mxu0 %v1874
        %2082 = vmatprep.subr.mxu0 %v1884
        %2083 = vmatpush1.msra.mxu0 %v1882
        %2084 = vmatprep.subr.mxu0 %v1892
        %2085 = vmatpush1.msra.mxu0 %v1890
        %2086 = vmatprep.subr.mxu0 %v1900
        %2087 = vmatpush1.msra.mxu0 %v1898
        %2088 = vmatprep.subr.mxu0 %v1908
        %2089 = vmatpush1.msra.mxu0 %v1906
        %2090 = vmatprep.subr.mxu0 %v1916
        %2091 = vmatpush1.msra.mxu0 %v1914
        %2092 = vmatprep.subr.mxu0 %v1924
        %2093 = vmatpush1.msra.mxu0 %v1922
        %2094 = vmatprep.subr.mxu0 %v1932
        %2095 = vmatpush1.msra.mxu0 %v1930
        %2096 = vmatprep.subr.mxu0 %v1940
        %2097 = vmatpush1.msra.mxu0 %v1938
        %2098 = vmatprep.subr.mxu0 %v1948
        %2099 = vmatpush1.msra.mxu0 %v1946
        %2100 = vmatprep.subr.mxu0 %v1956
        %2101 = vmatpush1.msra.mxu0 %v1954
        %2102 = vmatprep.subr.mxu0 %v1964
        %2103 = vmatpush1.msra.mxu0 %v1962
        %2104 = vmatprep.subr.mxu0 %v1972
        %2105 = vmatpush1.msra.mxu0 %v1970
        %2106 = vmatprep.subr.mxu0 %v1980
        %2107 = vmatpush1.msra.mxu0 %v1978
        %2108 = vmatprep.subr.mxu0 %v1988
        %2109 = vmatpush1.msra.mxu0 %v1986
        %2110 = vmatprep.subr.mxu0 %v1996
        %2111 = vmatpush1.msra.mxu0 %v1994
        %2112 = vmatprep.subr.mxu0 %v2004
        %2113 = vmatpush1.msra.mxu0 %v2002
        %2114 = vmatprep.subr.mxu0 %v2012
        %2115 = vmatpush1.msra.mxu0 %v2010
        %2116 = vmatprep.subr.mxu0 %v2020
        %2117 = vmatpush1.msra.mxu0 %v2018
        %2118 = vmatprep.subr.mxu0 %v2028
        %2119 = vmatpush1.msra.mxu0 %v2026
        %2120 = vmatprep.subr.mxu0 %v2036
        %2121 = vmatpush1.msra.mxu0 %v2034
        %2122 = vmatprep.subr.mxu0 %v2044
        %2123 = vmatpush1.msra.mxu0 %v2042
        %2124 = vmatprep.mubr.f32.mxu0 %v2057
        %2125 = vmatmul.mubr.f32.gmra.mrb[0].mxu0 %v2056
        %v2126 = vpop.f32.mrb[0].mxu0
        %v2127 = vadd.f32 0.0, %v2126
        %v2128 = vpop.f32.mrb[0].mxu0
        %v2129 = vadd.f32 0.0, %v2128
        %2130 = vdwg.mxu0
        %2131 = vmatprep.subr.mxu0 %v1800
        %2132 = vmatpush1.msra.mxu0 %v1798
        %2133 = vmatprep.subr.mxu0 %v1808
        %2134 = vmatpush1.msra.mxu0 %v1806
        %2135 = vmatprep.subr.mxu0 %v1816
        %2136 = vmatpush1.msra.mxu0 %v1814
        %2137 = vmatprep.subr.mxu0 %v1824
        %2138 = vmatpush1.msra.mxu0 %v1822
        %2139 = vmatprep.subr.mxu0 %v1832
        %2140 = vmatpush1.msra.mxu0 %v1830
        %2141 = vmatprep.subr.mxu0 %v1840
        %2142 = vmatpush1.msra.mxu0 %v1838
        %2143 = vmatprep.subr.mxu0 %v1848
        %2144 = vmatpush1.msra.mxu0 %v1846
        %2145 = vmatprep.subr.mxu0 %v1856
        %2146 = vmatpush1.msra.mxu0 %v1854
        %2147 = vmatprep.subr.mxu0 %v1864
        %2148 = vmatpush1.msra.mxu0 %v1862
        %2149 = vmatprep.subr.mxu0 %v1872
        %2150 = vmatpush1.msra.mxu0 %v1870
        %2151 = vmatprep.subr.mxu0 %v1880
        %2152 = vmatpush1.msra.mxu0 %v1878
        %2153 = vmatprep.subr.mxu0 %v1888
        %2154 = vmatpush1.msra.mxu0 %v1886
        %2155 = vmatprep.subr.mxu0 %v1896
        %2156 = vmatpush1.msra.mxu0 %v1894
        %2157 = vmatprep.subr.mxu0 %v1904
        %2158 = vmatpush1.msra.mxu0 %v1902
        %2159 = vmatprep.subr.mxu0 %v1912
        %2160 = vmatpush1.msra.mxu0 %v1910
        %2161 = vmatprep.subr.mxu0 %v1920
        %2162 = vmatpush1.msra.mxu0 %v1918
        %2163 = vmatprep.subr.mxu0 %v1928
        %2164 = vmatpush1.msra.mxu0 %v1926
        %2165 = vmatprep.subr.mxu0 %v1936
        %2166 = vmatpush1.msra.mxu0 %v1934
        %2167 = vmatprep.subr.mxu0 %v1944
        %2168 = vmatpush1.msra.mxu0 %v1942
        %2169 = vmatprep.subr.mxu0 %v1952
        %2170 = vmatpush1.msra.mxu0 %v1950
        %2171 = vmatprep.subr.mxu0 %v1960
        %2172 = vmatpush1.msra.mxu0 %v1958
        %2173 = vmatprep.subr.mxu0 %v1968
        %2174 = vmatpush1.msra.mxu0 %v1966
        %2175 = vmatprep.subr.mxu0 %v1976
        %2176 = vmatpush1.msra.mxu0 %v1974
        %2177 = vmatprep.subr.mxu0 %v1984
        %2178 = vmatpush1.msra.mxu0 %v1982
        %2179 = vmatprep.subr.mxu0 %v1992
        %2180 = vmatpush1.msra.mxu0 %v1990
        %2181 = vmatprep.subr.mxu0 %v2000
        %2182 = vmatpush1.msra.mxu0 %v1998
        %2183 = vmatprep.subr.mxu0 %v2008
        %2184 = vmatpush1.msra.mxu0 %v2006
        %2185 = vmatprep.subr.mxu0 %v2016
        %2186 = vmatpush1.msra.mxu0 %v2014
        %2187 = vmatprep.subr.mxu0 %v2024
        %2188 = vmatpush1.msra.mxu0 %v2022
        %2189 = vmatprep.subr.mxu0 %v2032
        %2190 = vmatpush1.msra.mxu0 %v2030
        %2191 = vmatprep.subr.mxu0 %v2040
        %2192 = vmatpush1.msra.mxu0 %v2038
        %2193 = vmatprep.subr.mxu0 %v2048
        %2194 = vmatpush1.msra.mxu0 %v2046
        %2195 = vmatprep.mubr.f32.mxu0 %v2057
        %2196 = vmatmul.mubr.f32.gmra.mrb[0].mxu0 %v2056
        %v2197 = vpop.f32.mrb[0].mxu0
        %v2198 = vadd.f32 0.0, %v2197
        %v2199 = vpop.f32.mrb[0].mxu0
        %v2200 = vadd.f32 0.0, %v2199
        %2201 = vdwg.mxu0
        %v2206 = vrot.slane %v2127, 1
        %v2207 = vrot.slane %v2129, 1
        %v2208 = vrot.slane %v2198, 1
        %v2209 = vrot.slane %v2200, 1
        %v2214 = vrcp.pop %v2206
        %v2215 = vmul.f32 %v2127, %v2214
        %v2216 = vrcp.pop %v2207
        %v2217 = vmul.f32 %v2129, %v2216
        %v2218 = vrcp.pop %v2208
        %v2219 = vmul.f32 %v2198, %v2218
        %v2220 = vrcp.pop %v2209
        %v2221 = vmul.f32 %v2200, %v2220
        %v2226 = vcombine.low %v2215, %v2217
        %v2227 = vcombine.low %v2219, %v2221
        %v2229 = vunpack.c.l.s4 1966171168
        %v2230 = vunpack.c.0.s8 %v2229
        %v2231 = vlaneseq
        %v2232 = vshrl.u32 %v2231, 7
        %v2233 = vsub.s32 %v2230, %v2232
        %v2234 = vrot.slane %v2226, %v2233
        %v2236 = vunpack.c.l.s4 1966171168
        %v2237 = vunpack.c.0.s8 %v2236
        %v2238 = vlaneseq
        %v2239 = vshrl.u32 %v2238, 7
        %v2240 = vsub.s32 %v2237, %v2239
        %v2241 = vrot.slane %v2227, %v2240
        %v2242 = vcombine.low %v2234, %v2241
        %v2244 = vunpack.c.l.s4 1966171168
        %v2245 = vunpack.c.0.s8 %v2244
        %v2246 = vlaneseq
        %v2247 = vshrl.u32 %v2246, 7
        %v2248 = vsub.s32 %v2245, %v2247
        %v2249 = vrot.slane %v2242, %v2248
        %v2251 = vlaneseq
        %vm2252 = vcmp.ge.s32.totalorder %v2251, 0
        %vm2253 = vcmp.lt.s32.totalorder %v2251, 512
        %vm2254 = vmand %vm2252, %vm2253
        %2255 = vst.msk [vmem:[%s273] sm:$0xf] %vm2254, %v2249
        %s2256 = sand.u32 %s139, 1
        %s2257 = scalar_lea.sflag [#allocation4], %s2256
        %s2258 = sand.u32 %s139, 1
        %s2259 = smul.addr %s2258, 1024
        %s2260 = scalar_lea.vmem [#allocation5], %s2259
        %s2261 = sand.u32 %s167, 1
        %s2262 = scalar_lea.sflag [#allocation7], %s2261
        %s2263 = sand.u32 %s167, 1
        %s2264 = smul.addr %s2263, 4
        %s2265 = scalar_lea.vmem [#allocation6], %s2264
        // Predicated region
        $region41: #{tpu_custom_call.1} parent=35 // pred_check
          %p2266 = pneg %p149
        $region42: #{tpu_custom_call.1} parent=35 // pred_check_branch
          %2268 = sbr.rel (%p2266) target = $region44
        $region43: #{tpu_custom_call.1} parent=35 // pred_region
          %s2269 = smul.u32 4, %s31
          %s2271 = ssub.s32 16384, 16384
          %2272 = vsyncadd %s2257, %s2271
          %s2273 = smul.addr %s30, 128
          %s2274 = sadd.s32 %s2269, %s2273
          %s2275 = smul.addr %s2274, 128
          %s2276 = scalar_lea.hbm %s4, %s2275
          %s2277 = sshll.u32 %s2260, 4
          %s2278 = int_to_ptr.vmem [resolvable:$true] %s2277
          %2283 = dma.vmem_to_hbm [thread:$0]  %s2278, 16384, %s2276, %s2257, 512, 512, 32
        $region44: #{tpu_custom_call.1} parent=35 // pred_fallthru
          _
        // Predicated region
        $region45: #{tpu_custom_call.1} parent=35 // pred_check
          %p2284 = pneg %p177
        $region46: #{tpu_custom_call.1} parent=35 // pred_check_branch
          %2286 = sbr.rel (%p2284) target = $region48
        $region47: #{tpu_custom_call.1} parent=35 // pred_region
          %s2287 = smul.u32 4, %s31
          %s2289 = ssub.s32 64, 64
          %2290 = vsyncadd %s2262, %s2289
          %s2291 = smul.addr %s30, 4
          %s2292 = sadd.s32 %s2287, %s2291
          %s2293 = smul.addr %s2292, 16
          %s2294 = scalar_lea.hbm %s5, %s2293
          %s2296 = sshll.u32 %s2265, 4
          %s2297 = int_to_ptr.vmem [resolvable:$true] %s2296
          %2299 = dma.vmem_to_hbm [thread:$0]  %s2297, 64, %s2294, %s2262
        $region48: #{tpu_custom_call.1} parent=35 // pred_fallthru
          _
      $region36: #{tpu_custom_call.1} parent=5 // pred_fallthru
        _
      %p2300 = scmp.le.s32.totalorder 2, %s21
      // Predicated region
      $region49: #{tpu_custom_call.1} parent=5 // pred_check
        %p2301 = pneg %p2300
      $region50: #{tpu_custom_call.1} parent=5 // pred_check_branch
        %2303 = sbr.rel (%p2301) target = $region52
      $region51: #{tpu_custom_call.1} parent=5 // pred_region
        %s2304 = ssub.s32 %s21, 2
        // Predicated region
        $region53: #{tpu_custom_call.1} parent=51 // pred_check
          %p2305 = pneg %p155
        $region54: #{tpu_custom_call.1} parent=51 // pred_check_branch
          %2307 = sbr.rel (%p2305) target = $region56
        $region55: #{tpu_custom_call.1} parent=51 // pred_region
          %s2308 = sand.u32 %s140, 1
          %s2309 = scalar_lea.sflag [#allocation4], %s2308
          %s2310 = sand.u32 %s140, 1
          %s2311 = smul.addr %s2310, 1024
          %s2312 = scalar_lea.vmem [#allocation5], %s2311
          %2313 = dma.done %s2309, 16384
        $region56: #{tpu_custom_call.1} parent=51 // pred_fallthru
          _
        // Predicated region
        $region57: #{tpu_custom_call.1} parent=51 // pred_check
          %p2314 = pneg %p183
        $region58: #{tpu_custom_call.1} parent=51 // pred_check_branch
          %2316 = sbr.rel (%p2314) target = $region60
        $region59: #{tpu_custom_call.1} parent=51 // pred_region
          %s2317 = sand.u32 %s168, 1
          %s2318 = scalar_lea.sflag [#allocation7], %s2317
          %s2319 = sand.u32 %s168, 1
          %s2320 = smul.addr %s2319, 4
          %s2321 = scalar_lea.vmem [#allocation6], %s2320
          %2322 = dma.done %s2318, 64
        $region60: #{tpu_custom_call.1} parent=51 // pred_fallthru
          _
      $region52: #{tpu_custom_call.1} parent=5 // pred_fallthru
        _
    $region6: #{tpu_custom_call.1} parent=1 // loop_footer
      %s25 = sadd.s32 1, %s21
    $region7: #{tpu_custom_call.1} parent=1 // loop_footer_branch
      %20 = sbr.rel target = $region3
    $region8: #{tpu_custom_call.1} parent=1 // loop_exit
      _
    %2323 = vsyncpa [#allocation3], 1
    %s2324 = scalar_lea.sflag [#allocation3], 1
    %2325 = vsyncpa %s2324, 1
    %2326 = vsyncpa [#allocation4], 1
    %s2327 = scalar_lea.sflag [#allocation4], 1
    %2328 = vsyncpa %s2327, 1
    %2329 = vsyncpa [#allocation7], 1
    %s2330 = scalar_lea.sflag [#allocation7], 1
    %2331 = vsyncpa %s2330, 1

</llo_original>
